<compile_context>
chip_gen: v6e
topology: v6e:2x2x1
jax: 0.10.0
libtpu: 0.0.40
codegen_flags: <defaults>
</compile_context>

<pallas_src>
import functools

import jax
import jax.numpy as jnp
from jax.experimental import pallas as pl
from jax.experimental.pallas import tpu as pltpu


def _round_up(n, m):
    return ((n + m - 1) // m) * m


# ----------------------------------------------------------------------------
# Kernel 1: 2x2 max-pool, stride 2.
# Wrapper reshapes NCHW (metadata-only) to rows of shape (N*C*(H/2), 2*W) where
# each row holds two consecutive image rows back-to-back.  The kernel pools the
# H pair with a contiguous-halves max and the W pair with two exact 0/1
# selection matmuls (even / odd columns) followed by a max.
# ----------------------------------------------------------------------------
def _maxpool2x2_kernel(x_ref, sel_even_ref, sel_odd_ref, o_ref):
    x = x_ref[...]                       # (TM, 2*W)
    w2 = x.shape[-1]
    w = w2 // 2
    hmax = jnp.maximum(x[:, :w], x[:, w:])            # pool over the H pairs
    even = jnp.dot(hmax, sel_even_ref[...], preferred_element_type=jnp.float32)
    odd = jnp.dot(hmax, sel_odd_ref[...], preferred_element_type=jnp.float32)
    o_ref[...] = jnp.maximum(even, odd).astype(o_ref.dtype)


def maxpool2x2(x, *, tile_rows=512):
    """x: (N, C, H, W) -> (N, C, H//2, W//2), NCHW preserved."""
    N, C, H, W = x.shape
    assert H % 2 == 0 and W % 2 == 0, "MaxPool2d(2) path expects even H, W"
    Hh, Wh = H // 2, W // 2
    M = N * C * Hh

    xr = x.reshape(M, 2 * W)             # metadata-only reshape of NCHW

    # Big row tiles (cheap per-step overhead), but keep >=2 grid steps so both
    # v7x TensorCores get work; pad rows to a tile multiple instead of asserting.
    TM = min(tile_rows, _round_up(pl.cdiv(M, 2), 8))
    Mp = _round_up(M, TM)
    if Mp != M:
        xr = jnp.pad(xr, ((0, Mp - M), (0, 0)))

    rows = jnp.arange(W)[:, None]
    cols = jnp.arange(Wh)[None, :]
    sel_even = (rows == 2 * cols).astype(x.dtype)      # (W, W//2)
    sel_odd = (rows == 2 * cols + 1).astype(x.dtype)   # (W, W//2)

    out = pl.pallas_call(
        _maxpool2x2_kernel,
        out_shape=jax.ShapeDtypeStruct((Mp, Wh), x.dtype),
        grid_spec=pltpu.PrefetchScalarGridSpec(
            num_scalar_prefetch=0,
            grid=(Mp // TM,),
            in_specs=[
                pl.BlockSpec((TM, 2 * W), lambda i: (i, 0)),
                pl.BlockSpec((W, Wh), lambda i: (0, 0)),
                pl.BlockSpec((W, Wh), lambda i: (0, 0)),
            ],
            out_specs=pl.BlockSpec((TM, Wh), lambda i: (i, 0)),
        ),
        compiler_params=pltpu.CompilerParams(
            dimension_semantics=("parallel",),
            vmem_limit_bytes=32 * 1024 * 1024,
        ),
    )(xr, sel_even, sel_odd)

    return out[:M].reshape(N, C, Hh, Wh)


# ----------------------------------------------------------------------------
# Kernel 2: fused DoubleConv = (Conv3x3 + folded BN + ReLU) x 2.
# The (already zero-padded) image is flattened to (C, Lp) with Lp = (H+2)*(W+2),
# so each 3x3 tap is a contiguous lane-slice shift plus a (Cout, Cin) @ (Cin, L)
# matmul.  Wrap-around columns are zeroed with a precomputed lane mask, the
# intermediate activation is re-embedded into a zero-padded VMEM scratch, and
# the second conv reads it directly (no HBM round trip).
# ----------------------------------------------------------------------------
def _double_conv_kernel(x_ref, w1_ref, s1_ref, b1_ref, w2_ref, s2_ref, b2_ref,
                        mask_ref, o_ref, h_ref, *, wpad):
    lp = x_ref.shape[-1]
    lv = lp - 2 * wpad - 2        # flat positions whose full 3x3 stencil is in range
    base = wpad + 1               # flat index of the first interior pixel (1, 1)
    mask = mask_ref[...]          # (1, lv): 1.0 on interior columns, 0.0 on l/r pad

    def conv3x3(src, w_ref):
        n_out = w_ref.shape[1]
        acc = jnp.zeros((n_out, lv), dtype=jnp.float32)
        for dy in range(3):
            for dx in range(3):
                off = dy * wpad + dx
                acc = acc + jnp.dot(
                    w_ref[3 * dy + dx], src[:, off:off + lv],
                    preferred_element_type=jnp.float32)
        return acc

    # Conv1 + folded BatchNorm + ReLU (mask zeroes the wrap-around columns so
    # they act as zero padding for conv2).
    y1 = conv3x3(x_ref[0], w1_ref)
    y1 = jnp.maximum(y1 * s1_ref[...] + b1_ref[...], 0.0) * mask

    # Re-embed the interior into a zero-padded flat image held in VMEM scratch.
    h_ref[...] = jnp.zeros(h_ref.shape, dtype=h_ref.dtype)
    h_ref[:, pl.ds(base, lv)] = y1

    # Conv2 + folded BatchNorm + ReLU.
    y2 = conv3x3(h_ref[...], w2_ref)
    y2 = jnp.maximum(y2 * s2_ref[...] + b2_ref[...], 0.0) * mask

    o_ref[0] = jnp.zeros(o_ref.shape[1:], dtype=o_ref.dtype)
    o_ref[0, :, pl.ds(base, lv)] = y2.astype(o_ref.dtype)


def double_conv3x3_bn_relu_x2(p, conv1_w, conv1_b, g1, be1, m1, v1,
                              conv2_w, conv2_b, g2, be2, m2, v2, *, eps=1e-5):
    """p: (N, C_in, H, W) -> (N, C_out, H, W) (inference-mode BN folded)."""
    N, C_in, Hp, Wp = p.shape
    C_mid = conv1_w.shape[0]
    C_out = conv2_w.shape[0]
    Hpad, Wpad = Hp + 2, Wp + 2
    Lp = Hpad * Wpad
    Lv = Lp - 2 * Wpad - 2
    base = Wpad + 1

    # Small pad of the pooled tensor + metadata flatten (NCHW preserved).
    x_pad = jnp.pad(p, ((0, 0), (0, 0), (1, 1), (1, 1)))
    x_flat = x_pad.reshape(N, C_in, Lp)

    # Per-tap weight matrices: w_m[3*dy+dx] == weight[:, :, dy, dx].
    w1m = jnp.transpose(conv1_w, (2, 3, 0, 1)).reshape(9, C_mid, C_in)
    w2m = jnp.transpose(conv2_w, (2, 3, 0, 1)).reshape(9, C_out, C_mid)

    # Fold conv bias + BatchNorm (inference) into per-channel scale / bias.
    s1 = g1 / jnp.sqrt(v1 + eps)
    b1 = be1 + (conv1_b - m1) * s1
    s2 = g2 / jnp.sqrt(v2 + eps)
    b2 = be2 + (conv2_b - m2) * s2
    s1 = s1.reshape(C_mid, 1).astype(jnp.float32)
    b1 = b1.reshape(C_mid, 1).astype(jnp.float32)
    s2 = s2.reshape(C_out, 1).astype(jnp.float32)
    b2 = b2.reshape(C_out, 1).astype(jnp.float32)

    # Interior-column mask over the valid flat window.
    col = (jnp.arange(Lv) + base) % Wpad
    mask = ((col >= 1) & (col <= Wp)).astype(jnp.float32).reshape(1, Lv)

    flops = 2 * N * Lv * 9 * (C_in * C_mid + C_mid * C_out)
    bytes_accessed = 4 * (x_flat.size + N * C_out * Lp + w1m.size + w2m.size)
    cost = pl.CostEstimate(flops=int(flops), transcendentals=0,
                           bytes_accessed=int(bytes_accessed))

    kernel = functools.partial(_double_conv_kernel, wpad=Wpad)
    out_flat = pl.pallas_call(
        kernel,
        out_shape=jax.ShapeDtypeStruct((N, C_out, Lp), p.dtype),
        grid_spec=pltpu.PrefetchScalarGridSpec(
            num_scalar_prefetch=0,
            grid=(N,),
            in_specs=[
                pl.BlockSpec((1, C_in, Lp), lambda n: (n, 0, 0)),
                pl.BlockSpec((9, C_mid, C_in), lambda n: (0, 0, 0)),
                pl.BlockSpec((C_mid, 1), lambda n: (0, 0)),
                pl.BlockSpec((C_mid, 1), lambda n: (0, 0)),
                pl.BlockSpec((9, C_out, C_mid), lambda n: (0, 0, 0)),
                pl.BlockSpec((C_out, 1), lambda n: (0, 0)),
                pl.BlockSpec((C_out, 1), lambda n: (0, 0)),
                pl.BlockSpec((1, Lv), lambda n: (0, 0)),
            ],
            out_specs=pl.BlockSpec((1, C_out, Lp), lambda n: (n, 0, 0)),
            scratch_shapes=[pltpu.VMEM((C_mid, Lp), jnp.float32)],
        ),
        compiler_params=pltpu.CompilerParams(
            dimension_semantics=("parallel",),
            vmem_limit_bytes=32 * 1024 * 1024,
        ),
        cost_estimate=cost,
    )(x_flat, w1m, s1, b1, w2m, s2, b2, mask)

    # Drop the 1-pixel border (junk / zero region) -> (N, C_out, Hp, Wp).
    return out_flat.reshape(N, C_out, Hpad, Wpad)[:, :, 1:-1, 1:-1]


def down_forward(x, conv1_w, conv1_b, g1, be1, m1, v1,
                 conv2_w, conv2_b, g2, be2, m2, v2, *, eps=1e-5):
    """Down: MaxPool2d(2) -> DoubleConv (conv3x3+BN+ReLU twice)."""
    pooled = maxpool2x2(x)
    return double_conv3x3_bn_relu_x2(
        pooled, conv1_w, conv1_b, g1, be1, m1, v1,
        conv2_w, conv2_b, g2, be2, m2, v2, eps=eps)


# ----------------------------------------------------------------------------
# Plain-JAX reference (same inference-mode BN semantics) for the self-check.
# ----------------------------------------------------------------------------
def _reference_down(x, conv1_w, conv1_b, g1, be1, m1, v1,
                    conv2_w, conv2_b, g2, be2, m2, v2, eps=1e-5):
    N, C, H, W = x.shape
    p = x.reshape(N, C, H // 2, 2, W // 2, 2).max(axis=(3, 5))

    def conv_bn_relu(t, w, cb, g, b, m, v):
        y = jax.lax.conv_general_dilated(
            t, w, window_strides=(1, 1), padding="SAME",
            dimension_numbers=("NCHW", "OIHW", "NCHW"),
            precision=jax.lax.Precision.HIGHEST)
        y = y + cb[None, :, None, None]
        s = (g / jnp.sqrt(v + eps))[None, :, None, None]
        y = (y - m[None, :, None, None]) * s + b[None, :, None, None]
        return jnp.maximum(y, 0.0)

    y = conv_bn_relu(p, conv1_w, conv1_b, g1, be1, m1, v1)
    y = conv_bn_relu(y, conv2_w, conv2_b, g2, be2, m2, v2)
    return y


if __name__ == "__main__":
    key = jax.random.PRNGKey(0)
    ks = jax.random.split(key, 13)

    N, C_in, C_out, H, W = 2, 4, 8, 16, 16
    C_mid = C_out  # DoubleConv default: mid_channels == out_channels

    x = jax.random.normal(ks[0], (N, C_in, H, W), dtype=jnp.float32)

    conv1_w = jax.random.normal(ks[1], (C_mid, C_in, 3, 3), jnp.float32) * 0.1
    conv1_b = jax.random.normal(ks[2], (C_mid,), jnp.float32) * 0.1
    g1 = 1.0 + 0.1 * jax.random.normal(ks[3], (C_mid,), jnp.float32)
    be1 = 0.1 * jax.random.normal(ks[4], (C_mid,), jnp.float32)
    m1 = 0.1 * jax.random.normal(ks[5], (C_mid,), jnp.float32)
    v1 = jax.random.uniform(ks[6], (C_mid,), jnp.float32, 0.5, 1.5)

    conv2_w = jax.random.normal(ks[7], (C_out, C_mid, 3, 3), jnp.float32) * 0.1
    conv2_b = jax.random.normal(ks[8], (C_out,), jnp.float32) * 0.1
    g2 = 1.0 + 0.1 * jax.random.normal(ks[9], (C_out,), jnp.float32)
    be2 = 0.1 * jax.random.normal(ks[10], (C_out,), jnp.float32)
    m2 = 0.1 * jax.random.normal(ks[11], (C_out,), jnp.float32)
    v2 = jax.random.uniform(ks[12], (C_out,), jnp.float32, 0.5, 1.5)

    params = (conv1_w, conv1_b, g1, be1, m1, v1,
              conv2_w, conv2_b, g2, be2, m2, v2)

    out = jax.jit(down_forward)(x, *params)
    jax.block_until_ready(out)

    ref = _reference_down(x, *params)
    assert out.shape == (N, C_out, H // 2, W // 2)
    assert jnp.allclose(out, ref, atol=1e-4, rtol=1e-4)

    print("KERNEL_OK")
</pallas_src>

<mosaic_0001>
module attributes {stable_mosaic.version = 11 : i64} {
  func.func @_maxpool2x2_kernel(%arg0: i32, %arg1: memref<32x32xf32, #tpu.memory_space<vmem>>, %arg2: memref<16x8xf32, #tpu.memory_space<vmem>>, %arg3: memref<16x8xf32, #tpu.memory_space<vmem>>, %arg4: memref<32x8xf32, #tpu.memory_space<vmem>>) attributes {dimension_semantics = [#tpu.dimension_semantics<parallel>], iteration_bounds = array<i64: 2>, scalar_prefetch = 0 : i64, scratch_operands = 0 : i64, tpu.core_type = #tpu.core_type<tc>, window_params = [{transform_indices = @transform_0, window_bounds = array<i64: 32, 32>}, {pipeline_mode = #tpu.pipeline_mode<synchronous>, transform_indices = @transform_1, window_bounds = array<i64: 16, 8>}, {pipeline_mode = #tpu.pipeline_mode<synchronous>, transform_indices = @transform_2, window_bounds = array<i64: 16, 8>}, {transform_indices = @transform_3, window_bounds = array<i64: 32, 8>}]} {
    %c0 = arith.constant 0 : index
    %c0_0 = arith.constant 0 : index
    %0 = vector.load %arg1[%c0, %c0_0] : memref<32x32xf32, #tpu.memory_space<vmem>>, vector<32x32xf32>
    %1 = vector.extract_strided_slice %0 {offsets = [0, 0], sizes = [32, 16], strides = [1, 1]} : vector<32x32xf32> to vector<32x16xf32>
    %2 = vector.extract_strided_slice %0 {offsets = [0, 16], sizes = [32, 16], strides = [1, 1]} : vector<32x32xf32> to vector<32x16xf32>
    %3 = arith.maximumf %1, %2 : vector<32x16xf32>
    %c0_1 = arith.constant 0 : index
    %c0_2 = arith.constant 0 : index
    %4 = vector.load %arg2[%c0_1, %c0_2] : memref<16x8xf32, #tpu.memory_space<vmem>>, vector<16x8xf32>
    %cst = arith.constant dense<0.000000e+00> : vector<32x8xf32>
    %5 = tpu.matmul %3, %4, %cst {dimension_numbers = #tpu.dot_dimension_numbers<[1], [0], [0], [1], [0, 0, 1, 1], [], []>} : vector<32x16xf32>, vector<16x8xf32>, vector<32x8xf32> -> vector<32x8xf32>
    %c0_3 = arith.constant 0 : index
    %c0_4 = arith.constant 0 : index
    %6 = vector.load %arg3[%c0_3, %c0_4] : memref<16x8xf32, #tpu.memory_space<vmem>>, vector<16x8xf32>
    %cst_5 = arith.constant dense<0.000000e+00> : vector<32x8xf32>
    %7 = tpu.matmul %3, %6, %cst_5 {dimension_numbers = #tpu.dot_dimension_numbers<[1], [0], [0], [1], [0, 0, 1, 1], [], []>} : vector<32x16xf32>, vector<16x8xf32>, vector<32x8xf32> -> vector<32x8xf32>
    %8 = arith.maximumf %5, %7 : vector<32x8xf32>
    %c0_6 = arith.constant 0 : index
    %c0_7 = arith.constant 0 : index
    %9 = vector.load %arg4[%c0_6, %c0_7] : memref<32x8xf32, #tpu.memory_space<vmem>>, vector<32x8xf32>
    tpu.vector_store %arg4[%c0_6, %c0_7], %8 {strides = array<i32>} : memref<32x8xf32, #tpu.memory_space<vmem>>, vector<32x8xf32>,
    return
  }
  func.func @transform_0(%arg0: i32) -> (i32, i32) {
    %c0_i32 = arith.constant 0 : i32
    %c0_i32_0 = arith.constant 0 : i32
    return %arg0, %c0_i32 : i32, i32
  }
  func.func @transform_1(%arg0: i32) -> (i32, i32) {
    %c0_i32 = arith.constant 0 : i32
    %c0_i32_0 = arith.constant 0 : i32
    %c0_i32_1 = arith.constant 0 : i32
    return %c0_i32, %c0_i32_0 : i32, i32
  }
  func.func @transform_2(%arg0: i32) -> (i32, i32) {
    %c0_i32 = arith.constant 0 : i32
    %c0_i32_0 = arith.constant 0 : i32
    %c0_i32_1 = arith.constant 0 : i32
    return %c0_i32, %c0_i32_0 : i32, i32
  }
  func.func @transform_3(%arg0: i32) -> (i32, i32) {
    %c0_i32 = arith.constant 0 : i32
    %c0_i32_0 = arith.constant 0 : i32
    return %arg0, %c0_i32 : i32, i32
  }
}

module attributes {stable_mosaic.version = 11 : i64} {
  func.func @_double_conv_kernel(%arg0: i32, %arg1: memref<1x4x100xf32, #tpu.memory_space<vmem>>, %arg2: memref<9x8x4xf32, #tpu.memory_space<vmem>>, %arg3: memref<8x1xf32, #tpu.memory_space<vmem>>, %arg4: memref<8x1xf32, #tpu.memory_space<vmem>>, %arg5: memref<9x8x8xf32, #tpu.memory_space<vmem>>, %arg6: memref<8x1xf32, #tpu.memory_space<vmem>>, %arg7: memref<8x1xf32, #tpu.memory_space<vmem>>, %arg8: memref<1x78xf32, #tpu.memory_space<vmem>>, %arg9: memref<1x8x100xf32, #tpu.memory_space<vmem>>, %arg10: memref<8x100xf32, #tpu.memory_space<vmem>>) attributes {dimension_semantics = [#tpu.dimension_semantics<parallel>], iteration_bounds = array<i64: 2>, scalar_prefetch = 0 : i64, scratch_operands = 1 : i64, tpu.core_type = #tpu.core_type<tc>, window_params = [{transform_indices = @transform_0, window_bounds = array<i64: 1, 4, 100>}, {pipeline_mode = #tpu.pipeline_mode<synchronous>, transform_indices = @transform_1, window_bounds = array<i64: 9, 8, 4>}, {pipeline_mode = #tpu.pipeline_mode<synchronous>, transform_indices = @transform_2, window_bounds = array<i64: 8, 1>}, {pipeline_mode = #tpu.pipeline_mode<synchronous>, transform_indices = @transform_3, window_bounds = array<i64: 8, 1>}, {pipeline_mode = #tpu.pipeline_mode<synchronous>, transform_indices = @transform_4, window_bounds = array<i64: 9, 8, 8>}, {pipeline_mode = #tpu.pipeline_mode<synchronous>, transform_indices = @transform_5, window_bounds = array<i64: 8, 1>}, {pipeline_mode = #tpu.pipeline_mode<synchronous>, transform_indices = @transform_6, window_bounds = array<i64: 8, 1>}, {pipeline_mode = #tpu.pipeline_mode<synchronous>, transform_indices = @transform_7, window_bounds = array<i64: 1, 78>}, {transform_indices = @transform_8, window_bounds = array<i64: 1, 8, 100>}]} {
    %c0 = arith.constant 0 : index
    %c0_0 = arith.constant 0 : index
    %0 = vector.load %arg8[%c0, %c0_0] : memref<1x78xf32, #tpu.memory_space<vmem>>, vector<1x78xf32>
    %c0_1 = arith.constant 0 : index
    %c0_2 = arith.constant 0 : index
    %c0_3 = arith.constant 0 : index
    %1 = vector.load %arg1[%c0_1, %c0_2, %c0_3] : memref<1x4x100xf32, #tpu.memory_space<vmem>>, vector<1x4x100xf32>
    %2 = vector.shape_cast %1 : vector<1x4x100xf32> to vector<4x100xf32>
    %cst = arith.constant 0.000000e+00 : f32
    %3 = vector.broadcast %cst : f32 to vector<8x78xf32>
    %c0_4 = arith.constant 0 : index
    %c0_5 = arith.constant 0 : index
    %c0_6 = arith.constant 0 : index
    %4 = vector.load %arg2[%c0_4, %c0_5, %c0_6] : memref<9x8x4xf32, #tpu.memory_space<vmem>>, vector<1x8x4xf32>
    %5 = vector.shape_cast %4 : vector<1x8x4xf32> to vector<8x4xf32>
    %6 = vector.extract_strided_slice %2 {offsets = [0, 0], sizes = [4, 78], strides = [1, 1]} : vector<4x100xf32> to vector<4x78xf32>
    %cst_7 = arith.constant dense<0.000000e+00> : vector<8x78xf32>
    %7 = tpu.matmul %5, %6, %cst_7 {dimension_numbers = #tpu.dot_dimension_numbers<[1], [0], [0], [1], [0, 0, 1, 1], [], []>} : vector<8x4xf32>, vector<4x78xf32>, vector<8x78xf32> -> vector<8x78xf32>
    %8 = arith.addf %3, %7 : vector<8x78xf32>
    %c1 = arith.constant 1 : index
    %c0_8 = arith.constant 0 : index
    %c0_9 = arith.constant 0 : index
    %9 = vector.load %arg2[%c1, %c0_8, %c0_9] : memref<9x8x4xf32, #tpu.memory_space<vmem>>, vector<1x8x4xf32>
    %10 = vector.shape_cast %9 : vector<1x8x4xf32> to vector<8x4xf32>
    %11 = vector.extract_strided_slice %2 {offsets = [0, 1], sizes = [4, 78], strides = [1, 1]} : vector<4x100xf32> to vector<4x78xf32>
    %cst_10 = arith.constant dense<0.000000e+00> : vector<8x78xf32>
    %12 = tpu.matmul %10, %11, %cst_10 {dimension_numbers = #tpu.dot_dimension_numbers<[1], [0], [0], [1], [0, 0, 1, 1], [], []>} : vector<8x4xf32>, vector<4x78xf32>, vector<8x78xf32> -> vector<8x78xf32>
    %13 = arith.addf %8, %12 : vector<8x78xf32>
    %c2 = arith.constant 2 : index
    %c0_11 = arith.constant 0 : index
    %c0_12 = arith.constant 0 : index
    %14 = vector.load %arg2[%c2, %c0_11, %c0_12] : memref<9x8x4xf32, #tpu.memory_space<vmem>>, vector<1x8x4xf32>
    %15 = vector.shape_cast %14 : vector<1x8x4xf32> to vector<8x4xf32>
    %16 = vector.extract_strided_slice %2 {offsets = [0, 2], sizes = [4, 78], strides = [1, 1]} : vector<4x100xf32> to vector<4x78xf32>
    %cst_13 = arith.constant dense<0.000000e+00> : vector<8x78xf32>
    %17 = tpu.matmul %15, %16, %cst_13 {dimension_numbers = #tpu.dot_dimension_numbers<[1], [0], [0], [1], [0, 0, 1, 1], [], []>} : vector<8x4xf32>, vector<4x78xf32>, vector<8x78xf32> -> vector<8x78xf32>
    %18 = arith.addf %13, %17 : vector<8x78xf32>
    %c3 = arith.constant 3 : index
    %c0_14 = arith.constant 0 : index
    %c0_15 = arith.constant 0 : index
    %19 = vector.load %arg2[%c3, %c0_14, %c0_15] : memref<9x8x4xf32, #tpu.memory_space<vmem>>, vector<1x8x4xf32>
    %20 = vector.shape_cast %19 : vector<1x8x4xf32> to vector<8x4xf32>
    %21 = vector.extract_strided_slice %2 {offsets = [0, 10], sizes = [4, 78], strides = [1, 1]} : vector<4x100xf32> to vector<4x78xf32>
    %cst_16 = arith.constant dense<0.000000e+00> : vector<8x78xf32>
    %22 = tpu.matmul %20, %21, %cst_16 {dimension_numbers = #tpu.dot_dimension_numbers<[1], [0], [0], [1], [0, 0, 1, 1], [], []>} : vector<8x4xf32>, vector<4x78xf32>, vector<8x78xf32> -> vector<8x78xf32>
    %23 = arith.addf %18, %22 : vector<8x78xf32>
    %c4 = arith.constant 4 : index
    %c0_17 = arith.constant 0 : index
    %c0_18 = arith.constant 0 : index
    %24 = vector.load %arg2[%c4, %c0_17, %c0_18] : memref<9x8x4xf32, #tpu.memory_space<vmem>>, vector<1x8x4xf32>
    %25 = vector.shape_cast %24 : vector<1x8x4xf32> to vector<8x4xf32>
    %26 = vector.extract_strided_slice %2 {offsets = [0, 11], sizes = [4, 78], strides = [1, 1]} : vector<4x100xf32> to vector<4x78xf32>
    %cst_19 = arith.constant dense<0.000000e+00> : vector<8x78xf32>
    %27 = tpu.matmul %25, %26, %cst_19 {dimension_numbers = #tpu.dot_dimension_numbers<[1], [0], [0], [1], [0, 0, 1, 1], [], []>} : vector<8x4xf32>, vector<4x78xf32>, vector<8x78xf32> -> vector<8x78xf32>
    %28 = arith.addf %23, %27 : vector<8x78xf32>
    %c5 = arith.constant 5 : index
    %c0_20 = arith.constant 0 : index
    %c0_21 = arith.constant 0 : index
    %29 = vector.load %arg2[%c5, %c0_20, %c0_21] : memref<9x8x4xf32, #tpu.memory_space<vmem>>, vector<1x8x4xf32>
    %30 = vector.shape_cast %29 : vector<1x8x4xf32> to vector<8x4xf32>
    %31 = vector.extract_strided_slice %2 {offsets = [0, 12], sizes = [4, 78], strides = [1, 1]} : vector<4x100xf32> to vector<4x78xf32>
    %cst_22 = arith.constant dense<0.000000e+00> : vector<8x78xf32>
    %32 = tpu.matmul %30, %31, %cst_22 {dimension_numbers = #tpu.dot_dimension_numbers<[1], [0], [0], [1], [0, 0, 1, 1], [], []>} : vector<8x4xf32>, vector<4x78xf32>, vector<8x78xf32> -> vector<8x78xf32>
    %33 = arith.addf %28, %32 : vector<8x78xf32>
    %c6 = arith.constant 6 : index
    %c0_23 = arith.constant 0 : index
    %c0_24 = arith.constant 0 : index
    %34 = vector.load %arg2[%c6, %c0_23, %c0_24] : memref<9x8x4xf32, #tpu.memory_space<vmem>>, vector<1x8x4xf32>
    %35 = vector.shape_cast %34 : vector<1x8x4xf32> to vector<8x4xf32>
    %36 = vector.extract_strided_slice %2 {offsets = [0, 20], sizes = [4, 78], strides = [1, 1]} : vector<4x100xf32> to vector<4x78xf32>
    %cst_25 = arith.constant dense<0.000000e+00> : vector<8x78xf32>
    %37 = tpu.matmul %35, %36, %cst_25 {dimension_numbers = #tpu.dot_dimension_numbers<[1], [0], [0], [1], [0, 0, 1, 1], [], []>} : vector<8x4xf32>, vector<4x78xf32>, vector<8x78xf32> -> vector<8x78xf32>
    %38 = arith.addf %33, %37 : vector<8x78xf32>
    %c7 = arith.constant 7 : index
    %c0_26 = arith.constant 0 : index
    %c0_27 = arith.constant 0 : index
    %39 = vector.load %arg2[%c7, %c0_26, %c0_27] : memref<9x8x4xf32, #tpu.memory_space<vmem>>, vector<1x8x4xf32>
    %40 = vector.shape_cast %39 : vector<1x8x4xf32> to vector<8x4xf32>
    %41 = vector.extract_strided_slice %2 {offsets = [0, 21], sizes = [4, 78], strides = [1, 1]} : vector<4x100xf32> to vector<4x78xf32>
    %cst_28 = arith.constant dense<0.000000e+00> : vector<8x78xf32>
    %42 = tpu.matmul %40, %41, %cst_28 {dimension_numbers = #tpu.dot_dimension_numbers<[1], [0], [0], [1], [0, 0, 1, 1], [], []>} : vector<8x4xf32>, vector<4x78xf32>, vector<8x78xf32> -> vector<8x78xf32>
    %43 = arith.addf %38, %42 : vector<8x78xf32>
    %c8 = arith.constant 8 : index
    %c0_29 = arith.constant 0 : index
    %c0_30 = arith.constant 0 : index
    %44 = vector.load %arg2[%c8, %c0_29, %c0_30] : memref<9x8x4xf32, #tpu.memory_space<vmem>>, vector<1x8x4xf32>
    %45 = vector.shape_cast %44 : vector<1x8x4xf32> to vector<8x4xf32>
    %46 = vector.extract_strided_slice %2 {offsets = [0, 22], sizes = [4, 78], strides = [1, 1]} : vector<4x100xf32> to vector<4x78xf32>
    %cst_31 = arith.constant dense<0.000000e+00> : vector<8x78xf32>
    %47 = tpu.matmul %45, %46, %cst_31 {dimension_numbers = #tpu.dot_dimension_numbers<[1], [0], [0], [1], [0, 0, 1, 1], [], []>} : vector<8x4xf32>, vector<4x78xf32>, vector<8x78xf32> -> vector<8x78xf32>
    %48 = arith.addf %43, %47 : vector<8x78xf32>
    %c0_32 = arith.constant 0 : index
    %c0_33 = arith.constant 0 : index
    %49 = vector.load %arg3[%c0_32, %c0_33] : memref<8x1xf32, #tpu.memory_space<vmem>>, vector<8x1xf32>
    %50 = vector.broadcast %49 : vector<8x1xf32> to vector<8x78xf32>
    %51 = arith.mulf %48, %50 : vector<8x78xf32>
    %c0_34 = arith.constant 0 : index
    %c0_35 = arith.constant 0 : index
    %52 = vector.load %arg4[%c0_34, %c0_35] : memref<8x1xf32, #tpu.memory_space<vmem>>, vector<8x1xf32>
    %53 = vector.broadcast %52 : vector<8x1xf32> to vector<8x78xf32>
    %54 = arith.addf %51, %53 : vector<8x78xf32>
    %cst_36 = arith.constant 0.000000e+00 : f32
    %55 = vector.broadcast %cst_36 : f32 to vector<8x78xf32>
    %56 = arith.maximumf %54, %55 : vector<8x78xf32>
    %57 = vector.broadcast %0 : vector<1x78xf32> to vector<8x78xf32>
    %58 = arith.mulf %56, %57 : vector<8x78xf32>
    %cst_37 = arith.constant 0.000000e+00 : f32
    %59 = vector.broadcast %cst_37 : f32 to vector<8x100xf32>
    %c0_38 = arith.constant 0 : index
    %c0_39 = arith.constant 0 : index
    %60 = vector.load %arg10[%c0_38, %c0_39] : memref<8x100xf32, #tpu.memory_space<vmem>>, vector<8x100xf32>
    tpu.vector_store %arg10[%c0_38, %c0_39], %59 {strides = array<i32>} : memref<8x100xf32, #tpu.memory_space<vmem>>, vector<8x100xf32>,
    %c0_40 = arith.constant 0 : index
    %c11 = arith.constant 11 : index
    %61 = vector.load %arg10[%c0_40, %c11] : memref<8x100xf32, #tpu.memory_space<vmem>>, vector<8x78xf32>
    tpu.vector_store %arg10[%c0_40, %c11], %58 {strides = array<i32>} : memref<8x100xf32, #tpu.memory_space<vmem>>, vector<8x78xf32>,
    %c0_41 = arith.constant 0 : index
    %c0_42 = arith.constant 0 : index
    %62 = vector.load %arg10[%c0_41, %c0_42] : memref<8x100xf32, #tpu.memory_space<vmem>>, vector<8x100xf32>
    %cst_43 = arith.constant 0.000000e+00 : f32
    %63 = vector.broadcast %cst_43 : f32 to vector<8x78xf32>
    %c0_44 = arith.constant 0 : index
    %c0_45 = arith.constant 0 : index
    %c0_46 = arith.constant 0 : index
    %64 = vector.load %arg5[%c0_44, %c0_45, %c0_46] : memref<9x8x8xf32, #tpu.memory_space<vmem>>, vector<1x8x8xf32>
    %65 = vector.shape_cast %64 : vector<1x8x8xf32> to vector<8x8xf32>
    %66 = vector.extract_strided_slice %62 {offsets = [0, 0], sizes = [8, 78], strides = [1, 1]} : vector<8x100xf32> to vector<8x78xf32>
    %cst_47 = arith.constant dense<0.000000e+00> : vector<8x78xf32>
    %67 = tpu.matmul %65, %66, %cst_47 {dimension_numbers = #tpu.dot_dimension_numbers<[1], [0], [0], [1], [0, 0, 1, 1], [], []>} : vector<8x8xf32>, vector<8x78xf32>, vector<8x78xf32> -> vector<8x78xf32>
    %68 = arith.addf %63, %67 : vector<8x78xf32>
    %c1_48 = arith.constant 1 : index
    %c0_49 = arith.constant 0 : index
    %c0_50 = arith.constant 0 : index
    %69 = vector.load %arg5[%c1_48, %c0_49, %c0_50] : memref<9x8x8xf32, #tpu.memory_space<vmem>>, vector<1x8x8xf32>
    %70 = vector.shape_cast %69 : vector<1x8x8xf32> to vector<8x8xf32>
    %71 = vector.extract_strided_slice %62 {offsets = [0, 1], sizes = [8, 78], strides = [1, 1]} : vector<8x100xf32> to vector<8x78xf32>
    %cst_51 = arith.constant dense<0.000000e+00> : vector<8x78xf32>
    %72 = tpu.matmul %70, %71, %cst_51 {dimension_numbers = #tpu.dot_dimension_numbers<[1], [0], [0], [1], [0, 0, 1, 1], [], []>} : vector<8x8xf32>, vector<8x78xf32>, vector<8x78xf32> -> vector<8x78xf32>
    %73 = arith.addf %68, %72 : vector<8x78xf32>
    %c2_52 = arith.constant 2 : index
    %c0_53 = arith.constant 0 : index
    %c0_54 = arith.constant 0 : index
    %74 = vector.load %arg5[%c2_52, %c0_53, %c0_54] : memref<9x8x8xf32, #tpu.memory_space<vmem>>, vector<1x8x8xf32>
    %75 = vector.shape_cast %74 : vector<1x8x8xf32> to vector<8x8xf32>
    %76 = vector.extract_strided_slice %62 {offsets = [0, 2], sizes = [8, 78], strides = [1, 1]} : vector<8x100xf32> to vector<8x78xf32>
    %cst_55 = arith.constant dense<0.000000e+00> : vector<8x78xf32>
    %77 = tpu.matmul %75, %76, %cst_55 {dimension_numbers = #tpu.dot_dimension_numbers<[1], [0], [0], [1], [0, 0, 1, 1], [], []>} : vector<8x8xf32>, vector<8x78xf32>, vector<8x78xf32> -> vector<8x78xf32>
    %78 = arith.addf %73, %77 : vector<8x78xf32>
    %c3_56 = arith.constant 3 : index
    %c0_57 = arith.constant 0 : index
    %c0_58 = arith.constant 0 : index
    %79 = vector.load %arg5[%c3_56, %c0_57, %c0_58] : memref<9x8x8xf32, #tpu.memory_space<vmem>>, vector<1x8x8xf32>
    %80 = vector.shape_cast %79 : vector<1x8x8xf32> to vector<8x8xf32>
    %81 = vector.extract_strided_slice %62 {offsets = [0, 10], sizes = [8, 78], strides = [1, 1]} : vector<8x100xf32> to vector<8x78xf32>
    %cst_59 = arith.constant dense<0.000000e+00> : vector<8x78xf32>
    %82 = tpu.matmul %80, %81, %cst_59 {dimension_numbers = #tpu.dot_dimension_numbers<[1], [0], [0], [1], [0, 0, 1, 1], [], []>} : vector<8x8xf32>, vector<8x78xf32>, vector<8x78xf32> -> vector<8x78xf32>
    %83 = arith.addf %78, %82 : vector<8x78xf32>
    %c4_60 = arith.constant 4 : index
    %c0_61 = arith.constant 0 : index
    %c0_62 = arith.constant 0 : index
    %84 = vector.load %arg5[%c4_60, %c0_61, %c0_62] : memref<9x8x8xf32, #tpu.memory_space<vmem>>, vector<1x8x8xf32>
    %85 = vector.shape_cast %84 : vector<1x8x8xf32> to vector<8x8xf32>
    %86 = vector.extract_strided_slice %62 {offsets = [0, 11], sizes = [8, 78], strides = [1, 1]} : vector<8x100xf32> to vector<8x78xf32>
    %cst_63 = arith.constant dense<0.000000e+00> : vector<8x78xf32>
    %87 = tpu.matmul %85, %86, %cst_63 {dimension_numbers = #tpu.dot_dimension_numbers<[1], [0], [0], [1], [0, 0, 1, 1], [], []>} : vector<8x8xf32>, vector<8x78xf32>, vector<8x78xf32> -> vector<8x78xf32>
    %88 = arith.addf %83, %87 : vector<8x78xf32>
    %c5_64 = arith.constant 5 : index
    %c0_65 = arith.constant 0 : index
    %c0_66 = arith.constant 0 : index
    %89 = vector.load %arg5[%c5_64, %c0_65, %c0_66] : memref<9x8x8xf32, #tpu.memory_space<vmem>>, vector<1x8x8xf32>
    %90 = vector.shape_cast %89 : vector<1x8x8xf32> to vector<8x8xf32>
    %91 = vector.extract_strided_slice %62 {offsets = [0, 12], sizes = [8, 78], strides = [1, 1]} : vector<8x100xf32> to vector<8x78xf32>
    %cst_67 = arith.constant dense<0.000000e+00> : vector<8x78xf32>
    %92 = tpu.matmul %90, %91, %cst_67 {dimension_numbers = #tpu.dot_dimension_numbers<[1], [0], [0], [1], [0, 0, 1, 1], [], []>} : vector<8x8xf32>, vector<8x78xf32>, vector<8x78xf32> -> vector<8x78xf32>
    %93 = arith.addf %88, %92 : vector<8x78xf32>
    %c6_68 = arith.constant 6 : index
    %c0_69 = arith.constant 0 : index
    %c0_70 = arith.constant 0 : index
    %94 = vector.load %arg5[%c6_68, %c0_69, %c0_70] : memref<9x8x8xf32, #tpu.memory_space<vmem>>, vector<1x8x8xf32>
    %95 = vector.shape_cast %94 : vector<1x8x8xf32> to vector<8x8xf32>
    %96 = vector.extract_strided_slice %62 {offsets = [0, 20], sizes = [8, 78], strides = [1, 1]} : vector<8x100xf32> to vector<8x78xf32>
    %cst_71 = arith.constant dense<0.000000e+00> : vector<8x78xf32>
    %97 = tpu.matmul %95, %96, %cst_71 {dimension_numbers = #tpu.dot_dimension_numbers<[1], [0], [0], [1], [0, 0, 1, 1], [], []>} : vector<8x8xf32>, vector<8x78xf32>, vector<8x78xf32> -> vector<8x78xf32>
    %98 = arith.addf %93, %97 : vector<8x78xf32>
    %c7_72 = arith.constant 7 : index
    %c0_73 = arith.constant 0 : index
    %c0_74 = arith.constant 0 : index
    %99 = vector.load %arg5[%c7_72, %c0_73, %c0_74] : memref<9x8x8xf32, #tpu.memory_space<vmem>>, vector<1x8x8xf32>
    %100 = vector.shape_cast %99 : vector<1x8x8xf32> to vector<8x8xf32>
    %101 = vector.extract_strided_slice %62 {offsets = [0, 21], sizes = [8, 78], strides = [1, 1]} : vector<8x100xf32> to vector<8x78xf32>
    %cst_75 = arith.constant dense<0.000000e+00> : vector<8x78xf32>
    %102 = tpu.matmul %100, %101, %cst_75 {dimension_numbers = #tpu.dot_dimension_numbers<[1], [0], [0], [1], [0, 0, 1, 1], [], []>} : vector<8x8xf32>, vector<8x78xf32>, vector<8x78xf32> -> vector<8x78xf32>
    %103 = arith.addf %98, %102 : vector<8x78xf32>
    %c8_76 = arith.constant 8 : index
    %c0_77 = arith.constant 0 : index
    %c0_78 = arith.constant 0 : index
    %104 = vector.load %arg5[%c8_76, %c0_77, %c0_78] : memref<9x8x8xf32, #tpu.memory_space<vmem>>, vector<1x8x8xf32>
    %105 = vector.shape_cast %104 : vector<1x8x8xf32> to vector<8x8xf32>
    %106 = vector.extract_strided_slice %62 {offsets = [0, 22], sizes = [8, 78], strides = [1, 1]} : vector<8x100xf32> to vector<8x78xf32>
    %cst_79 = arith.constant dense<0.000000e+00> : vector<8x78xf32>
    %107 = tpu.matmul %105, %106, %cst_79 {dimension_numbers = #tpu.dot_dimension_numbers<[1], [0], [0], [1], [0, 0, 1, 1], [], []>} : vector<8x8xf32>, vector<8x78xf32>, vector<8x78xf32> -> vector<8x78xf32>
    %108 = arith.addf %103, %107 : vector<8x78xf32>
    %c0_80 = arith.constant 0 : index
    %c0_81 = arith.constant 0 : index
    %109 = vector.load %arg6[%c0_80, %c0_81] : memref<8x1xf32, #tpu.memory_space<vmem>>, vector<8x1xf32>
    %110 = vector.broadcast %109 : vector<8x1xf32> to vector<8x78xf32>
    %111 = arith.mulf %108, %110 : vector<8x78xf32>
    %c0_82 = arith.constant 0 : index
    %c0_83 = arith.constant 0 : index
    %112 = vector.load %arg7[%c0_82, %c0_83] : memref<8x1xf32, #tpu.memory_space<vmem>>, vector<8x1xf32>
    %113 = vector.broadcast %112 : vector<8x1xf32> to vector<8x78xf32>
    %114 = arith.addf %111, %113 : vector<8x78xf32>
    %cst_84 = arith.constant 0.000000e+00 : f32
    %115 = vector.broadcast %cst_84 : f32 to vector<8x78xf32>
    %116 = arith.maximumf %114, %115 : vector<8x78xf32>
    %117 = vector.broadcast %0 : vector<1x78xf32> to vector<8x78xf32>
    %118 = arith.mulf %116, %117 : vector<8x78xf32>
    %cst_85 = arith.constant 0.000000e+00 : f32
    %119 = vector.broadcast %cst_85 : f32 to vector<8x100xf32>
    %c0_86 = arith.constant 0 : index
    %c0_87 = arith.constant 0 : index
    %c0_88 = arith.constant 0 : index
    %120 = vector.load %arg9[%c0_86, %c0_87, %c0_88] : memref<1x8x100xf32, #tpu.memory_space<vmem>>, vector<1x8x100xf32>
    %121 = vector.shape_cast %120 : vector<1x8x100xf32> to vector<8x100xf32>
    %122 = vector.shape_cast %119 : vector<8x100xf32> to vector<1x8x100xf32>
    tpu.vector_store %arg9[%c0_86, %c0_87, %c0_88], %122 {strides = array<i32>} : memref<1x8x100xf32, #tpu.memory_space<vmem>>, vector<1x8x100xf32>,
    %c0_89 = arith.constant 0 : index
    %c0_90 = arith.constant 0 : index
    %c11_91 = arith.constant 11 : index
    %123 = vector.load %arg9[%c0_89, %c0_90, %c11_91] : memref<1x8x100xf32, #tpu.memory_space<vmem>>, vector<1x8x78xf32>
    %124 = vector.shape_cast %123 : vector<1x8x78xf32> to vector<8x78xf32>
    %125 = vector.shape_cast %118 : vector<8x78xf32> to vector<1x8x78xf32>
    tpu.vector_store %arg9[%c0_89, %c0_90, %c11_91], %125 {strides = array<i32>} : memref<1x8x100xf32, #tpu.memory_space<vmem>>, vector<1x8x78xf32>,
    return
  }
  func.func @transform_0(%arg0: i32) -> (i32, i32, i32) {
    %c0_i32 = arith.constant 0 : i32
    %c0_i32_0 = arith.constant 0 : i32
    %c0_i32_1 = arith.constant 0 : i32
    return %arg0, %c0_i32, %c0_i32_0 : i32, i32, i32
  }
  func.func @transform_1(%arg0: i32) -> (i32, i32, i32) {
    %c0_i32 = arith.constant 0 : i32
    %c0_i32_0 = arith.constant 0 : i32
    %c0_i32_1 = arith.constant 0 : i32
    %c0_i32_2 = arith.constant 0 : i32
    return %c0_i32, %c0_i32_0, %c0_i32_1 : i32, i32, i32
  }
  func.func @transform_2(%arg0: i32) -> (i32, i32) {
    %c0_i32 = arith.constant 0 : i32
    %c0_i32_0 = arith.constant 0 : i32
    %c0_i32_1 = arith.constant 0 : i32
    return %c0_i32, %c0_i32_0 : i32, i32
  }
  func.func @transform_3(%arg0: i32) -> (i32, i32) {
    %c0_i32 = arith.constant 0 : i32
    %c0_i32_0 = arith.constant 0 : i32
    %c0_i32_1 = arith.constant 0 : i32
    return %c0_i32, %c0_i32_0 : i32, i32
  }
  func.func @transform_4(%arg0: i32) -> (i32, i32, i32) {
    %c0_i32 = arith.constant 0 : i32
    %c0_i32_0 = arith.constant 0 : i32
    %c0_i32_1 = arith.constant 0 : i32
    %c0_i32_2 = arith.constant 0 : i32
    return %c0_i32, %c0_i32_0, %c0_i32_1 : i32, i32, i32
  }
  func.func @transform_5(%arg0: i32) -> (i32, i32) {
    %c0_i32 = arith.constant 0 : i32
    %c0_i32_0 = arith.constant 0 : i32
    %c0_i32_1 = arith.constant 0 : i32
    return %c0_i32, %c0_i32_0 : i32, i32
  }
  func.func @transform_6(%arg0: i32) -> (i32, i32) {
    %c0_i32 = arith.constant 0 : i32
    %c0_i32_0 = arith.constant 0 : i32
    %c0_i32_1 = arith.constant 0 : i32
    return %c0_i32, %c0_i32_0 : i32, i32
  }
  func.func @transform_7(%arg0: i32) -> (i32, i32) {
    %c0_i32 = arith.constant 0 : i32
    %c0_i32_0 = arith.constant 0 : i32
    %c0_i32_1 = arith.constant 0 : i32
    return %c0_i32, %c0_i32_0 : i32, i32
  }
  func.func @transform_8(%arg0: i32) -> (i32, i32, i32) {
    %c0_i32 = arith.constant 0 : i32
    %c0_i32_0 = arith.constant 0 : i32
    %c0_i32_1 = arith.constant 0 : i32
    return %arg0, %c0_i32, %c0_i32_0 : i32, i32, i32
  }
}

</mosaic_0001>

<llo_original>
// kernel: down_forward.2
$region0: #{down_forward.2}
  #allocation0 [shape = 'u32[]', space=smem, size = 0x4, offset = 0x4, fixed_abs, tag = 'smem constant byte address 0x4 - core index']
  #allocation1 [shape = 'u32[144,128]{1,0:T(1,128)}', space=vmem, size = 0x12000, scoped, tag = 'internal scratch']
  %s0 = inlined_call_operand.vmem [shape: f32[64,32], index: 0, kind: input, shape index: {}]
  %s1 = inlined_call_operand.vmem [shape: f32[16,8], index: 1, kind: input, shape index: {}]
  %s2 = inlined_call_operand.vmem [shape: f32[16,8], index: 2, kind: input, shape index: {}]
  %s3 = inlined_call_operand.vmem [shape: f32[64,8], index: 3, kind: output, shape index: {}]
  %s4 = sld [smem:[#allocation0]]
  $region45: #{down_forward.2} parent=0
    _
  %s6 = ssub.s32 1, %s4
  %s7 = scalar_select 0, %s6, %s4
  loop: start=0, step=1, limit=4
  $region2: #{down_forward.2} parent=0 // loop_pre_header
    _
  $region3: #{down_forward.2} parent=0 // loop_header
    %s9 = sphi 0, %s13
    %p10 = scmp.ge.s32.totalorder %s9, 4
    %s19 = sphi 0, %s21
    %s22 = sphi 0, %s19
    %s23 = sphi 0, %s22
    %s39 = sphi 0, %s23
    %s43 = sphi 0, %s43
    %s45 = sphi 0, %s43
    %s46 = sphi 0, %s45
    %s60 = sphi 0, %s46
    %s64 = sphi 0, %s64
    %s66 = sphi 0, %s64
    %s67 = sphi 0, %s66
    %s81 = sphi 0, %s67
    %s87 = sphi 0, %s89
    %s90 = sphi 0, %s87
    %s91 = sphi 0, %s90
    %s107 = sphi 0, %s91
  $region4: #{down_forward.2} parent=0 // loop_header_branch
    %12 = sbr.rel (%p10) target = $region8
  $region5: #{down_forward.2} parent=0 // loop_body
    %s14 = ssub.s32 %s9, 1
    %s15 = ssub.s32 %s9, 2
    %s16 = sadd.s32 %s9, 1
    %s17 = ssub.s32 %s9, %s16
    %p18 = scmp.eq.s32.totalorder %s17, 0
    %s20 = sadd.s32 %s19, 1
    %s21 = scalar_select %p18, %s19, %s20
    %p24 = pneg %p18
    %p25 = scmp.eq.s32.totalorder %s9, 1
    %p26 = por %p24, %p25
    %p27 = scmp.ne.s32.totalorder %s19, %s22
    %p28 = scmp.eq.s32.totalorder %s9, 0
    %p29 = por %p27, %p28
    %p30 = scmp.ne.s32.totalorder %s19, %s22
    %p31 = scmp.eq.s32.totalorder %s14, 1
    %p32 = por %p30, %p31
    %p33 = scmp.ne.s32.totalorder %s22, %s23
    %p34 = scmp.eq.s32.totalorder %s14, 0
    %p35 = por %p33, %p34
    %p36 = scmp.ne.s32.totalorder %s22, %s23
    %p37 = scmp.eq.s32.totalorder %s15, 1
    %p38 = por %p36, %p37
    %p40 = scmp.ne.s32.totalorder %s23, %s39
    %p41 = scmp.eq.s32.totalorder %s15, 0
    %p42 = por %p40, %p41
    %s44 = sadd.s32 %s43, 1
    %p47 = scmp.eq.s32.totalorder %s9, 1
    %p48 = scmp.ne.s32.totalorder %s43, %s45
    %p49 = scmp.eq.s32.totalorder %s9, 0
    %p50 = por %p48, %p49
    %p51 = scmp.ne.s32.totalorder %s43, %s45
    %p52 = scmp.eq.s32.totalorder %s14, 1
    %p53 = por %p51, %p52
    %p54 = scmp.ne.s32.totalorder %s45, %s46
    %p55 = scmp.eq.s32.totalorder %s14, 0
    %p56 = por %p54, %p55
    %p57 = scmp.ne.s32.totalorder %s45, %s46
    %p58 = scmp.eq.s32.totalorder %s15, 1
    %p59 = por %p57, %p58
    %p61 = scmp.ne.s32.totalorder %s46, %s60
    %p62 = scmp.eq.s32.totalorder %s15, 0
    %p63 = por %p61, %p62
    %s65 = sadd.s32 %s64, 1
    %p68 = scmp.eq.s32.totalorder %s9, 1
    %p69 = scmp.ne.s32.totalorder %s64, %s66
    %p70 = scmp.eq.s32.totalorder %s9, 0
    %p71 = por %p69, %p70
    %p72 = scmp.ne.s32.totalorder %s64, %s66
    %p73 = scmp.eq.s32.totalorder %s14, 1
    %p74 = por %p72, %p73
    %p75 = scmp.ne.s32.totalorder %s66, %s67
    %p76 = scmp.eq.s32.totalorder %s14, 0
    %p77 = por %p75, %p76
    %p78 = scmp.ne.s32.totalorder %s66, %s67
    %p79 = scmp.eq.s32.totalorder %s15, 1
    %p80 = por %p78, %p79
    %p82 = scmp.ne.s32.totalorder %s67, %s81
    %p83 = scmp.eq.s32.totalorder %s15, 0
    %p84 = por %p82, %p83
    %s85 = ssub.s32 %s9, %s16
    %p86 = scmp.eq.s32.totalorder %s85, 0
    %s88 = sadd.s32 %s87, 1
    %s89 = scalar_select %p86, %s87, %s88
    %p92 = pneg %p86
    %p93 = scmp.eq.s32.totalorder %s9, 1
    %p94 = por %p92, %p93
    %p95 = scmp.ne.s32.totalorder %s87, %s90
    %p96 = scmp.eq.s32.totalorder %s9, 0
    %p97 = por %p95, %p96
    %p98 = scmp.ne.s32.totalorder %s87, %s90
    %p99 = scmp.eq.s32.totalorder %s14, 1
    %p100 = por %p98, %p99
    %p101 = scmp.ne.s32.totalorder %s90, %s91
    %p102 = scmp.eq.s32.totalorder %s14, 0
    %p103 = por %p101, %p102
    %p104 = scmp.ne.s32.totalorder %s90, %s91
    %p105 = scmp.eq.s32.totalorder %s15, 1
    %p106 = por %p104, %p105
    %p108 = scmp.ne.s32.totalorder %s91, %s107
    %p109 = scmp.eq.s32.totalorder %s15, 0
    %p110 = por %p108, %p109
    %p111 = scmp.le.s32.totalorder 1, %s9
    %p112 = scmp.lt.s32.totalorder %s9, 3
    %p113 = pnand %p111, %p112
    %p114 = pneg %p113
    // Predicated region
    $region9: #{down_forward.2} parent=5 // pred_check
      _
    $region10: #{down_forward.2} parent=5 // pred_check_branch
      %116 = sbr.rel (%p113) target = $region12
    $region11: #{down_forward.2} parent=5 // pred_region
      %s117 = ssub.s32 %s9, 1
      // Predicated region
      $region13: #{down_forward.2} parent=11 // pred_check
        %p118 = pneg %p56
      $region14: #{down_forward.2} parent=11 // pred_check_branch
        %120 = sbr.rel (%p118) target = $region16
      $region15: #{down_forward.2} parent=11 // pred_region
        _
      $region16: #{down_forward.2} parent=11 // pred_fallthru
        _
      // Predicated region
      $region17: #{down_forward.2} parent=11 // pred_check
        %p121 = pneg %p77
      $region18: #{down_forward.2} parent=11 // pred_check_branch
        %123 = sbr.rel (%p121) target = $region20
      $region19: #{down_forward.2} parent=11 // pred_region
        _
      $region20: #{down_forward.2} parent=11 // pred_fallthru
        _
    $region12: #{down_forward.2} parent=5 // pred_fallthru
      _
    %p124 = scmp.lt.s32.totalorder %s9, 2
    // Predicated region
    $region21: #{down_forward.2} parent=5 // pred_check
      %p125 = pneg %p124
    $region22: #{down_forward.2} parent=5 // pred_check_branch
      %127 = sbr.rel (%p125) target = $region24
    $region23: #{down_forward.2} parent=5 // pred_region
      // Predicated region
      $region25: #{down_forward.2} parent=23 // pred_check
        %p128 = pneg %p29
      $region26: #{down_forward.2} parent=23 // pred_check_branch
        %130 = sbr.rel (%p128) target = $region28
      $region27: #{down_forward.2} parent=23 // pred_region
        %s131 = smul.u32 4, %s9
        %p132 = scmp.lt.s32.totalorder %s131, 7
        %s133 = scalar_select %p132, %s131, 7
        %s134 = smul.addr %s133, 8
        %s135 = scalar_lea.vmem %s0, %s134
        %s136 = smul.u32 4, %s9
      $region28: #{down_forward.2} parent=23 // pred_fallthru
        _
    $region24: #{down_forward.2} parent=5 // pred_fallthru
      _
    %p137 = scmp.le.s32.totalorder 1, %s9
    %p138 = scmp.lt.s32.totalorder %s9, 3
    %p139 = pnand %p137, %p138
    %p140 = pneg %p139
    // Predicated region
    $region29: #{down_forward.2} parent=5 // pred_check
      _
    $region30: #{down_forward.2} parent=5 // pred_check_branch
      %142 = sbr.rel (%p139) target = $region32
    $region31: #{down_forward.2} parent=5 // pred_region
      %s143 = ssub.s32 %s9, 1
      %s144 = smul.u32 4, %s14
      %p145 = scmp.lt.s32.totalorder %s144, 7
      %s146 = scalar_select %p145, %s144, 7
      %s147 = smul.addr %s146, 8
      %s148 = scalar_lea.vmem %s0, %s147
      %p149 = pneg %p35
      %p150 = pneg %p32
      %p151 = pneg %p56
      %p152 = pneg %p53
      %p153 = pneg %p77
      %p154 = pneg %p74
      %p155 = pneg %p103
      %p156 = pneg %p100
      %s157 = smul.u32 4, %s14
      %p158 = scmp.lt.s32.totalorder %s157, 7
      %s159 = scalar_select %p158, %s157, 7
      %s160 = smul.addr %s159, 8
      %s161 = scalar_lea.vmem %s3, %s160
      %s162 = smul.u32 4, %s14
      %p163 = scmp.lt.s32.totalorder %s162, 7
      %s164 = scalar_select %p163, %s162, 7
      %s165 = smul.addr %s164, 8
      %s166 = scalar_lea.vmem %s0, %s165
      %s167 = smul.u32 4, %s14
      %s168 = smul.u32 4, %s14
      %p169 = scmp.lt.s32.totalorder %s168, 7
      %s170 = scalar_select %p169, %s168, 7
      %s171 = smul.addr %s170, 8
      %s172 = scalar_lea.vmem %s3, %s171
      %s173 = smul.u32 4, %s14
      %v174 = vld [vmem:[%s166] sm:$0xff]
      %v175 = vld [vmem:[%s166 + $0x8] sm:$0xff]
      %v176 = vld [vmem:[%s166 + $0x10] sm:$0xff]
      %v177 = vld [vmem:[%s166 + $0x18] sm:$0xff]
      %182 = vrot.lane.b32.xlu0 %v174, 112
      %v183 = vpop.permute.xlu0 %182
      %184 = vrot.lane.b32.xlu0 %v175, 112
      %v185 = vpop.permute.xlu0 %184
      %186 = vrot.lane.b32.xlu0 %v176, 112
      %v187 = vpop.permute.xlu0 %186
      %188 = vrot.lane.b32.xlu0 %v177, 112
      %v189 = vpop.permute.xlu0 %188
      %v194 = vmax.f32 %v174, %v183
      %v195 = vmax.f32 %v175, %v185
      %v196 = vmax.f32 %v176, %v187
      %v197 = vmax.f32 %v177, %v189
      %v198 = vld [vmem:[%s1] sm:$0xff]
      %v199 = vld [vmem:[%s1 + $0x8] sm:$0xff]
      %vm200 = vcmask 130048
      %v202 = vsel %vm200, %v194, 0
      %v205 = vsel %vm200, %v195, 0
      %v208 = vsel %vm200, %v196, 0
      %v211 = vsel %vm200, %v197, 0
      %213 = vmatprep.subr.mxu0 0.0
      %214 = vmatpush1.msra.mxu0 0.0
      %215 = vmatprep.subr.mxu0 0.0
      %216 = vmatpush1.msra.mxu0 0.0
      %217 = vmatprep.subr.mxu0 0.0
      %218 = vmatpush1.msra.mxu0 0.0
      %219 = vmatprep.subr.mxu0 0.0
      %220 = vmatpush1.msra.mxu0 0.0
      %221 = vmatprep.subr.mxu0 0.0
      %222 = vmatpush1.msra.mxu0 0.0
      %223 = vmatprep.subr.mxu0 0.0
      %224 = vmatpush1.msra.mxu0 0.0
      %225 = vmatprep.subr.mxu0 0.0
      %226 = vmatpush1.msra.mxu0 0.0
      %227 = vmatprep.subr.mxu0 0.0
      %228 = vmatpush1.msra.mxu0 0.0
      %229 = vmatprep.subr.mxu0 0.0
      %230 = vmatpush1.msra.mxu0 0.0
      %231 = vmatprep.subr.mxu0 0.0
      %232 = vmatpush1.msra.mxu0 0.0
      %233 = vmatprep.subr.mxu0 0.0
      %234 = vmatpush1.msra.mxu0 0.0
      %235 = vmatprep.subr.mxu0 0.0
      %236 = vmatpush1.msra.mxu0 0.0
      %237 = vmatprep.subr.mxu0 0.0
      %238 = vmatpush1.msra.mxu0 0.0
      %239 = vmatprep.subr.mxu0 0.0
      %240 = vmatpush1.msra.mxu0 0.0
      %241 = vmatprep.subr.mxu0 0.0
      %242 = vmatpush1.msra.mxu0 %v199
      %243 = vmatprep.subr.mxu0 0.0
      %244 = vmatpush1.msra.mxu0 %v198
      %245 = vmatprep.subr.mxu0 0.0
      %246 = vmatpush2.msra.mxu0 0.0
      %247 = vmatprep.subr.mxu0 0.0
      %248 = vmatpush2.msra.mxu0 0.0
      %249 = vmatprep.subr.mxu0 0.0
      %250 = vmatpush2.msra.mxu0 0.0
      %251 = vmatprep.subr.mxu0 0.0
      %252 = vmatpush2.msra.mxu0 0.0
      %253 = vmatprep.subr.mxu0 0.0
      %254 = vmatpush2.msra.mxu0 0.0
      %255 = vmatprep.subr.mxu0 0.0
      %256 = vmatpush2.msra.mxu0 0.0
      %257 = vmatprep.subr.mxu0 0.0
      %258 = vmatpush2.msra.mxu0 0.0
      %259 = vmatprep.subr.mxu0 0.0
      %260 = vmatpush2.msra.mxu0 0.0
      %261 = vmatprep.subr.mxu0 0.0
      %262 = vmatpush2.msra.mxu0 0.0
      %263 = vmatprep.subr.mxu0 0.0
      %264 = vmatpush2.msra.mxu0 0.0
      %265 = vmatprep.subr.mxu0 0.0
      %266 = vmatpush2.msra.mxu0 0.0
      %267 = vmatprep.subr.mxu0 0.0
      %268 = vmatpush2.msra.mxu0 0.0
      %269 = vmatprep.subr.mxu0 0.0
      %270 = vmatpush2.msra.mxu0 0.0
      %271 = vmatprep.subr.mxu0 0.0
      %272 = vmatpush2.msra.mxu0 0.0
      %273 = vmatprep.subr.mxu0 0.0
      %274 = vmatpush2.msra.mxu0 0.0
      %275 = vmatprep.subr.mxu0 0.0
      %276 = vmatpush2.msra.mxu0 0.0
      %277 = vmatprep.mubr.f32.mxu0 0.0
      %278 = vmatmul.mubr.f32.gmra.mxu0 %v202
      %v279 = vpop.f32.mrf.mxu0
      %v280 = vadd.f32 0.0, %v279
      %v281 = vpop.f32.mrf.mxu0
      %282 = vmatprep.mubr.f32.mxu0 0.0
      %283 = vmatmul.mubr.f32.gmra.mxu0 %v205
      %v284 = vpop.f32.mrf.mxu0
      %v285 = vadd.f32 0.0, %v284
      %v286 = vpop.f32.mrf.mxu0
      %287 = vmatprep.mubr.f32.mxu0 0.0
      %288 = vmatmul.mubr.f32.gmra.mxu0 %v208
      %v289 = vpop.f32.mrf.mxu0
      %v290 = vadd.f32 0.0, %v289
      %v291 = vpop.f32.mrf.mxu0
      %292 = vmatprep.mubr.f32.mxu0 0.0
      %293 = vmatmul.mubr.f32.gmra.mxu0 %v211
      %v294 = vpop.f32.mrf.mxu0
      %v295 = vadd.f32 0.0, %v294
      %v296 = vpop.f32.mrf.mxu0
      %297 = vdwg.mxu0
      %v298 = vld [vmem:[%s2] sm:$0xff]
      %v299 = vld [vmem:[%s2 + $0x8] sm:$0xff]
      %300 = vmatprep.subr.mxu0 0.0
      %301 = vmatpush1.msra.mxu0 0.0
      %302 = vmatprep.subr.mxu0 0.0
      %303 = vmatpush1.msra.mxu0 0.0
      %304 = vmatprep.subr.mxu0 0.0
      %305 = vmatpush1.msra.mxu0 0.0
      %306 = vmatprep.subr.mxu0 0.0
      %307 = vmatpush1.msra.mxu0 0.0
      %308 = vmatprep.subr.mxu0 0.0
      %309 = vmatpush1.msra.mxu0 0.0
      %310 = vmatprep.subr.mxu0 0.0
      %311 = vmatpush1.msra.mxu0 0.0
      %312 = vmatprep.subr.mxu0 0.0
      %313 = vmatpush1.msra.mxu0 0.0
      %314 = vmatprep.subr.mxu0 0.0
      %315 = vmatpush1.msra.mxu0 0.0
      %316 = vmatprep.subr.mxu0 0.0
      %317 = vmatpush1.msra.mxu0 0.0
      %318 = vmatprep.subr.mxu0 0.0
      %319 = vmatpush1.msra.mxu0 0.0
      %320 = vmatprep.subr.mxu0 0.0
      %321 = vmatpush1.msra.mxu0 0.0
      %322 = vmatprep.subr.mxu0 0.0
      %323 = vmatpush1.msra.mxu0 0.0
      %324 = vmatprep.subr.mxu0 0.0
      %325 = vmatpush1.msra.mxu0 0.0
      %326 = vmatprep.subr.mxu0 0.0
      %327 = vmatpush1.msra.mxu0 0.0
      %328 = vmatprep.subr.mxu0 0.0
      %329 = vmatpush1.msra.mxu0 %v299
      %330 = vmatprep.subr.mxu0 0.0
      %331 = vmatpush1.msra.mxu0 %v298
      %332 = vmatprep.subr.mxu0 0.0
      %333 = vmatpush2.msra.mxu0 0.0
      %334 = vmatprep.subr.mxu0 0.0
      %335 = vmatpush2.msra.mxu0 0.0
      %336 = vmatprep.subr.mxu0 0.0
      %337 = vmatpush2.msra.mxu0 0.0
      %338 = vmatprep.subr.mxu0 0.0
      %339 = vmatpush2.msra.mxu0 0.0
      %340 = vmatprep.subr.mxu0 0.0
      %341 = vmatpush2.msra.mxu0 0.0
      %342 = vmatprep.subr.mxu0 0.0
      %343 = vmatpush2.msra.mxu0 0.0
      %344 = vmatprep.subr.mxu0 0.0
      %345 = vmatpush2.msra.mxu0 0.0
      %346 = vmatprep.subr.mxu0 0.0
      %347 = vmatpush2.msra.mxu0 0.0
      %348 = vmatprep.subr.mxu0 0.0
      %349 = vmatpush2.msra.mxu0 0.0
      %350 = vmatprep.subr.mxu0 0.0
      %351 = vmatpush2.msra.mxu0 0.0
      %352 = vmatprep.subr.mxu0 0.0
      %353 = vmatpush2.msra.mxu0 0.0
      %354 = vmatprep.subr.mxu0 0.0
      %355 = vmatpush2.msra.mxu0 0.0
      %356 = vmatprep.subr.mxu0 0.0
      %357 = vmatpush2.msra.mxu0 0.0
      %358 = vmatprep.subr.mxu0 0.0
      %359 = vmatpush2.msra.mxu0 0.0
      %360 = vmatprep.subr.mxu0 0.0
      %361 = vmatpush2.msra.mxu0 0.0
      %362 = vmatprep.subr.mxu0 0.0
      %363 = vmatpush2.msra.mxu0 0.0
      %364 = vmatprep.mubr.f32.mxu0 0.0
      %365 = vmatmul.mubr.f32.gmra.mxu0 %v202
      %v366 = vpop.f32.mrf.mxu0
      %v367 = vadd.f32 0.0, %v366
      %v368 = vpop.f32.mrf.mxu0
      %369 = vmatprep.mubr.f32.mxu0 0.0
      %370 = vmatmul.mubr.f32.gmra.mxu0 %v205
      %v371 = vpop.f32.mrf.mxu0
      %v372 = vadd.f32 0.0, %v371
      %v373 = vpop.f32.mrf.mxu0
      %374 = vmatprep.mubr.f32.mxu0 0.0
      %375 = vmatmul.mubr.f32.gmra.mxu0 %v208
      %v376 = vpop.f32.mrf.mxu0
      %v377 = vadd.f32 0.0, %v376
      %v378 = vpop.f32.mrf.mxu0
      %379 = vmatprep.mubr.f32.mxu0 0.0
      %380 = vmatmul.mubr.f32.gmra.mxu0 %v211
      %v381 = vpop.f32.mrf.mxu0
      %v382 = vadd.f32 0.0, %v381
      %v383 = vpop.f32.mrf.mxu0
      %384 = vdwg.mxu0
      %v385 = vmax.f32 %v280, %v367
      %v386 = vmax.f32 %v285, %v372
      %v387 = vmax.f32 %v290, %v377
      %v388 = vmax.f32 %v295, %v382
      %vm389 = vcmask 64512
      %390 = vst.msk [vmem:[%s172] sm:$0xff] %vm389, %v385
      %391 = vst.msk [vmem:[%s172 + $0x8] sm:$0xff] %vm389, %v386
      %392 = vst.msk [vmem:[%s172 + $0x10] sm:$0xff] %vm389, %v387
      %393 = vst.msk [vmem:[%s172 + $0x18] sm:$0xff] %vm389, %v388
      %s394 = smul.u32 4, %s14
      %p395 = scmp.lt.s32.totalorder %s394, 7
      %s396 = scalar_select %p395, %s394, 7
      %s397 = smul.addr %s396, 8
      %s398 = scalar_lea.vmem %s3, %s397
      // Predicated region
      $region33: #{down_forward.2} parent=31 // pred_check
        %p399 = pneg %p100
      $region34: #{down_forward.2} parent=31 // pred_check_branch
        %401 = sbr.rel (%p399) target = $region36
      $region35: #{down_forward.2} parent=31 // pred_region
        %s402 = smul.u32 4, %s14
      $region36: #{down_forward.2} parent=31 // pred_fallthru
        _
    $region32: #{down_forward.2} parent=5 // pred_fallthru
      _
    %p403 = scmp.le.s32.totalorder 2, %s9
    // Predicated region
    $region37: #{down_forward.2} parent=5 // pred_check
      %p404 = pneg %p403
    $region38: #{down_forward.2} parent=5 // pred_check_branch
      %406 = sbr.rel (%p404) target = $region40
    $region39: #{down_forward.2} parent=5 // pred_region
      %s407 = ssub.s32 %s9, 2
      // Predicated region
      $region41: #{down_forward.2} parent=39 // pred_check
        %p408 = pneg %p106
      $region42: #{down_forward.2} parent=39 // pred_check_branch
        %410 = sbr.rel (%p408) target = $region44
      $region43: #{down_forward.2} parent=39 // pred_region
        %s411 = smul.u32 4, %s15
        %p412 = scmp.lt.s32.totalorder %s411, 7
        %s413 = scalar_select %p412, %s411, 7
        %s414 = smul.addr %s413, 8
        %s415 = scalar_lea.vmem %s3, %s414
      $region44: #{down_forward.2} parent=39 // pred_fallthru
        _
    $region40: #{down_forward.2} parent=5 // pred_fallthru
      _
  $region6: #{down_forward.2} parent=0 // loop_footer
    %s13 = sadd.s32 1, %s9
  $region7: #{down_forward.2} parent=0 // loop_footer_branch
    %8 = sbr.rel target = $region3
  $region8: #{down_forward.2} parent=0 // loop_exit
    _

// kernel: down_forward.3
$region0: #{down_forward.3}
  #allocation0 [shape = 'u32[]', space=smem, size = 0x4, offset = 0x4, fixed_abs, tag = 'smem constant byte address 0x4 - core index']
  #allocation1 [shape = 'u32[144,128]{1,0:T(1,128)}', space=vmem, size = 0x12000, scoped, tag = 'internal scratch']
  #allocation2 [shape = 'f32[8,100]{1,0:T(8,128)}', space=vmem, size = 0x1000, scoped, tag = 'scratch operand']
  %s0 = inlined_call_operand.vmem [shape: f32[2,4,100], index: 0, kind: input, shape index: {}]
  %s1 = inlined_call_operand.vmem [shape: f32[9,8,4], index: 1, kind: input, shape index: {}]
  %s2 = inlined_call_operand.vmem [shape: f32[8,1], index: 2, kind: input, shape index: {}]
  %s3 = inlined_call_operand.vmem [shape: f32[8,1], index: 3, kind: input, shape index: {}]
  %s4 = inlined_call_operand.vmem [shape: f32[9,8,8], index: 4, kind: input, shape index: {}]
  %s5 = inlined_call_operand.vmem [shape: f32[8,1], index: 5, kind: input, shape index: {}]
  %s6 = inlined_call_operand.vmem [shape: f32[8,1], index: 6, kind: input, shape index: {}]
  %s7 = inlined_call_operand.vmem [shape: f32[1,78], index: 7, kind: input, shape index: {}]
  %s8 = inlined_call_operand.vmem [shape: f32[2,8,100], index: 8, kind: output, shape index: {}]
  %s9 = sld [smem:[#allocation0]]
  $region65: #{down_forward.3} parent=0
    _
  %s11 = ssub.s32 1, %s9
  %s12 = scalar_select 0, %s11, %s9
  loop: start=0, step=1, limit=4
  $region2: #{down_forward.3} parent=0 // loop_pre_header
    _
  $region3: #{down_forward.3} parent=0 // loop_header
    %s14 = sphi 0, %s18
    %p15 = scmp.ge.s32.totalorder %s14, 4
    %s24 = sphi 0, %s26
    %s27 = sphi 0, %s24
    %s28 = sphi 0, %s27
    %s44 = sphi 0, %s28
    %s48 = sphi 0, %s48
    %s50 = sphi 0, %s48
    %s51 = sphi 0, %s50
    %s65 = sphi 0, %s51
    %s69 = sphi 0, %s69
    %s71 = sphi 0, %s69
    %s72 = sphi 0, %s71
    %s86 = sphi 0, %s72
    %s90 = sphi 0, %s90
    %s92 = sphi 0, %s90
    %s93 = sphi 0, %s92
    %s107 = sphi 0, %s93
    %s111 = sphi 0, %s111
    %s113 = sphi 0, %s111
    %s114 = sphi 0, %s113
    %s128 = sphi 0, %s114
    %s132 = sphi 0, %s132
    %s134 = sphi 0, %s132
    %s135 = sphi 0, %s134
    %s149 = sphi 0, %s135
    %s153 = sphi 0, %s153
    %s155 = sphi 0, %s153
    %s156 = sphi 0, %s155
    %s170 = sphi 0, %s156
    %s174 = sphi 0, %s174
    %s176 = sphi 0, %s174
    %s177 = sphi 0, %s176
    %s191 = sphi 0, %s177
    %s197 = sphi 0, %s199
    %s200 = sphi 0, %s197
    %s201 = sphi 0, %s200
    %s217 = sphi 0, %s201
  $region4: #{down_forward.3} parent=0 // loop_header_branch
    %17 = sbr.rel (%p15) target = $region8
  $region5: #{down_forward.3} parent=0 // loop_body
    %s19 = ssub.s32 %s14, 1
    %s20 = ssub.s32 %s14, 2
    %s21 = sadd.s32 %s14, 1
    %s22 = ssub.s32 %s14, %s21
    %p23 = scmp.eq.s32.totalorder %s22, 0
    %s25 = sadd.s32 %s24, 1
    %s26 = scalar_select %p23, %s24, %s25
    %p29 = pneg %p23
    %p30 = scmp.eq.s32.totalorder %s14, 1
    %p31 = por %p29, %p30
    %p32 = scmp.ne.s32.totalorder %s24, %s27
    %p33 = scmp.eq.s32.totalorder %s14, 0
    %p34 = por %p32, %p33
    %p35 = scmp.ne.s32.totalorder %s24, %s27
    %p36 = scmp.eq.s32.totalorder %s19, 1
    %p37 = por %p35, %p36
    %p38 = scmp.ne.s32.totalorder %s27, %s28
    %p39 = scmp.eq.s32.totalorder %s19, 0
    %p40 = por %p38, %p39
    %p41 = scmp.ne.s32.totalorder %s27, %s28
    %p42 = scmp.eq.s32.totalorder %s20, 1
    %p43 = por %p41, %p42
    %p45 = scmp.ne.s32.totalorder %s28, %s44
    %p46 = scmp.eq.s32.totalorder %s20, 0
    %p47 = por %p45, %p46
    %s49 = sadd.s32 %s48, 1
    %p52 = scmp.eq.s32.totalorder %s14, 1
    %p53 = scmp.ne.s32.totalorder %s48, %s50
    %p54 = scmp.eq.s32.totalorder %s14, 0
    %p55 = por %p53, %p54
    %p56 = scmp.ne.s32.totalorder %s48, %s50
    %p57 = scmp.eq.s32.totalorder %s19, 1
    %p58 = por %p56, %p57
    %p59 = scmp.ne.s32.totalorder %s50, %s51
    %p60 = scmp.eq.s32.totalorder %s19, 0
    %p61 = por %p59, %p60
    %p62 = scmp.ne.s32.totalorder %s50, %s51
    %p63 = scmp.eq.s32.totalorder %s20, 1
    %p64 = por %p62, %p63
    %p66 = scmp.ne.s32.totalorder %s51, %s65
    %p67 = scmp.eq.s32.totalorder %s20, 0
    %p68 = por %p66, %p67
    %s70 = sadd.s32 %s69, 1
    %p73 = scmp.eq.s32.totalorder %s14, 1
    %p74 = scmp.ne.s32.totalorder %s69, %s71
    %p75 = scmp.eq.s32.totalorder %s14, 0
    %p76 = por %p74, %p75
    %p77 = scmp.ne.s32.totalorder %s69, %s71
    %p78 = scmp.eq.s32.totalorder %s19, 1
    %p79 = por %p77, %p78
    %p80 = scmp.ne.s32.totalorder %s71, %s72
    %p81 = scmp.eq.s32.totalorder %s19, 0
    %p82 = por %p80, %p81
    %p83 = scmp.ne.s32.totalorder %s71, %s72
    %p84 = scmp.eq.s32.totalorder %s20, 1
    %p85 = por %p83, %p84
    %p87 = scmp.ne.s32.totalorder %s72, %s86
    %p88 = scmp.eq.s32.totalorder %s20, 0
    %p89 = por %p87, %p88
    %s91 = sadd.s32 %s90, 1
    %p94 = scmp.eq.s32.totalorder %s14, 1
    %p95 = scmp.ne.s32.totalorder %s90, %s92
    %p96 = scmp.eq.s32.totalorder %s14, 0
    %p97 = por %p95, %p96
    %p98 = scmp.ne.s32.totalorder %s90, %s92
    %p99 = scmp.eq.s32.totalorder %s19, 1
    %p100 = por %p98, %p99
    %p101 = scmp.ne.s32.totalorder %s92, %s93
    %p102 = scmp.eq.s32.totalorder %s19, 0
    %p103 = por %p101, %p102
    %p104 = scmp.ne.s32.totalorder %s92, %s93
    %p105 = scmp.eq.s32.totalorder %s20, 1
    %p106 = por %p104, %p105
    %p108 = scmp.ne.s32.totalorder %s93, %s107
    %p109 = scmp.eq.s32.totalorder %s20, 0
    %p110 = por %p108, %p109
    %s112 = sadd.s32 %s111, 1
    %p115 = scmp.eq.s32.totalorder %s14, 1
    %p116 = scmp.ne.s32.totalorder %s111, %s113
    %p117 = scmp.eq.s32.totalorder %s14, 0
    %p118 = por %p116, %p117
    %p119 = scmp.ne.s32.totalorder %s111, %s113
    %p120 = scmp.eq.s32.totalorder %s19, 1
    %p121 = por %p119, %p120
    %p122 = scmp.ne.s32.totalorder %s113, %s114
    %p123 = scmp.eq.s32.totalorder %s19, 0
    %p124 = por %p122, %p123
    %p125 = scmp.ne.s32.totalorder %s113, %s114
    %p126 = scmp.eq.s32.totalorder %s20, 1
    %p127 = por %p125, %p126
    %p129 = scmp.ne.s32.totalorder %s114, %s128
    %p130 = scmp.eq.s32.totalorder %s20, 0
    %p131 = por %p129, %p130
    %s133 = sadd.s32 %s132, 1
    %p136 = scmp.eq.s32.totalorder %s14, 1
    %p137 = scmp.ne.s32.totalorder %s132, %s134
    %p138 = scmp.eq.s32.totalorder %s14, 0
    %p139 = por %p137, %p138
    %p140 = scmp.ne.s32.totalorder %s132, %s134
    %p141 = scmp.eq.s32.totalorder %s19, 1
    %p142 = por %p140, %p141
    %p143 = scmp.ne.s32.totalorder %s134, %s135
    %p144 = scmp.eq.s32.totalorder %s19, 0
    %p145 = por %p143, %p144
    %p146 = scmp.ne.s32.totalorder %s134, %s135
    %p147 = scmp.eq.s32.totalorder %s20, 1
    %p148 = por %p146, %p147
    %p150 = scmp.ne.s32.totalorder %s135, %s149
    %p151 = scmp.eq.s32.totalorder %s20, 0
    %p152 = por %p150, %p151
    %s154 = sadd.s32 %s153, 1
    %p157 = scmp.eq.s32.totalorder %s14, 1
    %p158 = scmp.ne.s32.totalorder %s153, %s155
    %p159 = scmp.eq.s32.totalorder %s14, 0
    %p160 = por %p158, %p159
    %p161 = scmp.ne.s32.totalorder %s153, %s155
    %p162 = scmp.eq.s32.totalorder %s19, 1
    %p163 = por %p161, %p162
    %p164 = scmp.ne.s32.totalorder %s155, %s156
    %p165 = scmp.eq.s32.totalorder %s19, 0
    %p166 = por %p164, %p165
    %p167 = scmp.ne.s32.totalorder %s155, %s156
    %p168 = scmp.eq.s32.totalorder %s20, 1
    %p169 = por %p167, %p168
    %p171 = scmp.ne.s32.totalorder %s156, %s170
    %p172 = scmp.eq.s32.totalorder %s20, 0
    %p173 = por %p171, %p172
    %s175 = sadd.s32 %s174, 1
    %p178 = scmp.eq.s32.totalorder %s14, 1
    %p179 = scmp.ne.s32.totalorder %s174, %s176
    %p180 = scmp.eq.s32.totalorder %s14, 0
    %p181 = por %p179, %p180
    %p182 = scmp.ne.s32.totalorder %s174, %s176
    %p183 = scmp.eq.s32.totalorder %s19, 1
    %p184 = por %p182, %p183
    %p185 = scmp.ne.s32.totalorder %s176, %s177
    %p186 = scmp.eq.s32.totalorder %s19, 0
    %p187 = por %p185, %p186
    %p188 = scmp.ne.s32.totalorder %s176, %s177
    %p189 = scmp.eq.s32.totalorder %s20, 1
    %p190 = por %p188, %p189
    %p192 = scmp.ne.s32.totalorder %s177, %s191
    %p193 = scmp.eq.s32.totalorder %s20, 0
    %p194 = por %p192, %p193
    %s195 = ssub.s32 %s14, %s21
    %p196 = scmp.eq.s32.totalorder %s195, 0
    %s198 = sadd.s32 %s197, 1
    %s199 = scalar_select %p196, %s197, %s198
    %p202 = pneg %p196
    %p203 = scmp.eq.s32.totalorder %s14, 1
    %p204 = por %p202, %p203
    %p205 = scmp.ne.s32.totalorder %s197, %s200
    %p206 = scmp.eq.s32.totalorder %s14, 0
    %p207 = por %p205, %p206
    %p208 = scmp.ne.s32.totalorder %s197, %s200
    %p209 = scmp.eq.s32.totalorder %s19, 1
    %p210 = por %p208, %p209
    %p211 = scmp.ne.s32.totalorder %s200, %s201
    %p212 = scmp.eq.s32.totalorder %s19, 0
    %p213 = por %p211, %p212
    %p214 = scmp.ne.s32.totalorder %s200, %s201
    %p215 = scmp.eq.s32.totalorder %s20, 1
    %p216 = por %p214, %p215
    %p218 = scmp.ne.s32.totalorder %s201, %s217
    %p219 = scmp.eq.s32.totalorder %s20, 0
    %p220 = por %p218, %p219
    %p221 = scmp.le.s32.totalorder 1, %s14
    %p222 = scmp.lt.s32.totalorder %s14, 3
    %p223 = pnand %p221, %p222
    %p224 = pneg %p223
    // Predicated region
    $region9: #{down_forward.3} parent=5 // pred_check
      _
    $region10: #{down_forward.3} parent=5 // pred_check_branch
      %226 = sbr.rel (%p223) target = $region12
    $region11: #{down_forward.3} parent=5 // pred_region
      %s227 = ssub.s32 %s14, 1
      // Predicated region
      $region13: #{down_forward.3} parent=11 // pred_check
        %p228 = pneg %p61
      $region14: #{down_forward.3} parent=11 // pred_check_branch
        %230 = sbr.rel (%p228) target = $region16
      $region15: #{down_forward.3} parent=11 // pred_region
        _
      $region16: #{down_forward.3} parent=11 // pred_fallthru
        _
      // Predicated region
      $region17: #{down_forward.3} parent=11 // pred_check
        %p231 = pneg %p82
      $region18: #{down_forward.3} parent=11 // pred_check_branch
        %233 = sbr.rel (%p231) target = $region20
      $region19: #{down_forward.3} parent=11 // pred_region
        _
      $region20: #{down_forward.3} parent=11 // pred_fallthru
        _
      // Predicated region
      $region21: #{down_forward.3} parent=11 // pred_check
        %p234 = pneg %p103
      $region22: #{down_forward.3} parent=11 // pred_check_branch
        %236 = sbr.rel (%p234) target = $region24
      $region23: #{down_forward.3} parent=11 // pred_region
        _
      $region24: #{down_forward.3} parent=11 // pred_fallthru
        _
      // Predicated region
      $region25: #{down_forward.3} parent=11 // pred_check
        %p237 = pneg %p124
      $region26: #{down_forward.3} parent=11 // pred_check_branch
        %239 = sbr.rel (%p237) target = $region28
      $region27: #{down_forward.3} parent=11 // pred_region
        _
      $region28: #{down_forward.3} parent=11 // pred_fallthru
        _
      // Predicated region
      $region29: #{down_forward.3} parent=11 // pred_check
        %p240 = pneg %p145
      $region30: #{down_forward.3} parent=11 // pred_check_branch
        %242 = sbr.rel (%p240) target = $region32
      $region31: #{down_forward.3} parent=11 // pred_region
        _
      $region32: #{down_forward.3} parent=11 // pred_fallthru
        _
      // Predicated region
      $region33: #{down_forward.3} parent=11 // pred_check
        %p243 = pneg %p166
      $region34: #{down_forward.3} parent=11 // pred_check_branch
        %245 = sbr.rel (%p243) target = $region36
      $region35: #{down_forward.3} parent=11 // pred_region
        _
      $region36: #{down_forward.3} parent=11 // pred_fallthru
        _
      // Predicated region
      $region37: #{down_forward.3} parent=11 // pred_check
        %p246 = pneg %p187
      $region38: #{down_forward.3} parent=11 // pred_check_branch
        %248 = sbr.rel (%p246) target = $region40
      $region39: #{down_forward.3} parent=11 // pred_region
        _
      $region40: #{down_forward.3} parent=11 // pred_fallthru
        _
    $region12: #{down_forward.3} parent=5 // pred_fallthru
      _
    %p249 = scmp.lt.s32.totalorder %s14, 2
    // Predicated region
    $region41: #{down_forward.3} parent=5 // pred_check
      %p250 = pneg %p249
    $region42: #{down_forward.3} parent=5 // pred_check_branch
      %252 = sbr.rel (%p250) target = $region44
    $region43: #{down_forward.3} parent=5 // pred_region
      // Predicated region
      $region45: #{down_forward.3} parent=43 // pred_check
        %p253 = pneg %p34
      $region46: #{down_forward.3} parent=43 // pred_check_branch
        %255 = sbr.rel (%p253) target = $region48
      $region47: #{down_forward.3} parent=43 // pred_region
        %p256 = scmp.lt.s32.totalorder %s14, 1
        %s257 = scalar_select %p256, %s14, 1
        %s258 = smul.addr %s257, 4
        %s259 = scalar_lea.vmem %s0, %s258
      $region48: #{down_forward.3} parent=43 // pred_fallthru
        _
    $region44: #{down_forward.3} parent=5 // pred_fallthru
      _
    %p260 = scmp.le.s32.totalorder 1, %s14
    %p261 = scmp.lt.s32.totalorder %s14, 3
    %p262 = pnand %p260, %p261
    %p263 = pneg %p262
    // Predicated region
    $region49: #{down_forward.3} parent=5 // pred_check
      _
    $region50: #{down_forward.3} parent=5 // pred_check_branch
      %265 = sbr.rel (%p262) target = $region52
    $region51: #{down_forward.3} parent=5 // pred_region
      %s266 = ssub.s32 %s14, 1
      %p267 = scmp.lt.s32.totalorder %s19, 1
      %s268 = scalar_select %p267, %s19, 1
      %s269 = smul.addr %s268, 4
      %s270 = scalar_lea.vmem %s0, %s269
      %p271 = pneg %p40
      %p272 = pneg %p37
      %p273 = pneg %p61
      %p274 = pneg %p58
      %p275 = pneg %p82
      %p276 = pneg %p79
      %p277 = pneg %p103
      %p278 = pneg %p100
      %p279 = pneg %p124
      %p280 = pneg %p121
      %p281 = pneg %p145
      %p282 = pneg %p142
      %p283 = pneg %p166
      %p284 = pneg %p163
      %p285 = pneg %p187
      %p286 = pneg %p184
      %p287 = pneg %p213
      %p288 = pneg %p210
      %p289 = scmp.lt.s32.totalorder %s19, 1
      %s290 = scalar_select %p289, %s19, 1
      %s291 = smul.addr %s290, 8
      %s292 = scalar_lea.vmem %s8, %s291
      %p293 = scmp.lt.s32.totalorder %s19, 1
      %s294 = scalar_select %p293, %s19, 1
      %s295 = smul.addr %s294, 4
      %s296 = scalar_lea.vmem %s0, %s295
      %p297 = scmp.lt.s32.totalorder %s19, 1
      %s298 = scalar_select %p297, %s19, 1
      %s299 = smul.addr %s298, 8
      %s300 = scalar_lea.vmem %s8, %s299
      %v301 = vld [vmem:[%s7] sm:$0x1]
      %v302 = vld [vmem:[%s296] sm:$0xf]
      %v303 = vld [vmem:[%s1] sm:$0xff]
      %s304 = scalar_lea.vmem %s1, 8
      %v305 = vld [vmem:[%s304] sm:$0xff]
      %307 = vrot.lane.b32.xlu0 %v302, 127
      %v308 = vpop.permute.xlu0 %307
      %vm309 = vcmask 31744
      %v311 = vsel %vm309, %v305, 0
      %vm313 = vcmask 1043456
      %v314 = vsel %vm313, %v308, 0
      %316 = vmatprep.subr.mxu0 0.0
      %317 = vmatpush1.msra.mxu0 0.0
      %318 = vmatprep.subr.mxu0 0.0
      %319 = vmatpush1.msra.mxu0 0.0
      %320 = vmatprep.subr.mxu0 0.0
      %321 = vmatpush1.msra.mxu0 0.0
      %322 = vmatprep.subr.mxu0 0.0
      %323 = vmatpush1.msra.mxu0 0.0
      %324 = vmatprep.subr.mxu0 0.0
      %325 = vmatpush1.msra.mxu0 0.0
      %326 = vmatprep.subr.mxu0 0.0
      %327 = vmatpush1.msra.mxu0 0.0
      %328 = vmatprep.subr.mxu0 0.0
      %329 = vmatpush1.msra.mxu0 0.0
      %330 = vmatprep.subr.mxu0 0.0
      %331 = vmatpush1.msra.mxu0 0.0
      %332 = vmatprep.subr.mxu0 0.0
      %333 = vmatpush1.msra.mxu0 0.0
      %334 = vmatprep.subr.mxu0 0.0
      %335 = vmatpush1.msra.mxu0 0.0
      %336 = vmatprep.subr.mxu0 0.0
      %337 = vmatpush1.msra.mxu0 0.0
      %338 = vmatprep.subr.mxu0 0.0
      %339 = vmatpush1.msra.mxu0 0.0
      %340 = vmatprep.subr.mxu0 0.0
      %341 = vmatpush1.msra.mxu0 0.0
      %342 = vmatprep.subr.mxu0 0.0
      %343 = vmatpush1.msra.mxu0 0.0
      %344 = vmatprep.subr.mxu0 0.0
      %345 = vmatpush1.msra.mxu0 0.0
      %346 = vmatprep.subr.mxu0 0.0
      %347 = vmatpush1.msra.mxu0 %v314
      %348 = vmatprep.subr.mxu0 0.0
      %349 = vmatpush2.msra.mxu0 0.0
      %350 = vmatprep.subr.mxu0 0.0
      %351 = vmatpush2.msra.mxu0 0.0
      %352 = vmatprep.subr.mxu0 0.0
      %353 = vmatpush2.msra.mxu0 0.0
      %354 = vmatprep.subr.mxu0 0.0
      %355 = vmatpush2.msra.mxu0 0.0
      %356 = vmatprep.subr.mxu0 0.0
      %357 = vmatpush2.msra.mxu0 0.0
      %358 = vmatprep.subr.mxu0 0.0
      %359 = vmatpush2.msra.mxu0 0.0
      %360 = vmatprep.subr.mxu0 0.0
      %361 = vmatpush2.msra.mxu0 0.0
      %362 = vmatprep.subr.mxu0 0.0
      %363 = vmatpush2.msra.mxu0 0.0
      %364 = vmatprep.subr.mxu0 0.0
      %365 = vmatpush2.msra.mxu0 0.0
      %366 = vmatprep.subr.mxu0 0.0
      %367 = vmatpush2.msra.mxu0 0.0
      %368 = vmatprep.subr.mxu0 0.0
      %369 = vmatpush2.msra.mxu0 0.0
      %370 = vmatprep.subr.mxu0 0.0
      %371 = vmatpush2.msra.mxu0 0.0
      %372 = vmatprep.subr.mxu0 0.0
      %373 = vmatpush2.msra.mxu0 0.0
      %374 = vmatprep.subr.mxu0 0.0
      %375 = vmatpush2.msra.mxu0 0.0
      %376 = vmatprep.subr.mxu0 0.0
      %377 = vmatpush2.msra.mxu0 0.0
      %378 = vmatprep.subr.mxu0 0.0
      %379 = vmatpush2.msra.mxu0 0.0
      %380 = vmatprep.mubr.f32.mxu0 0.0
      %381 = vmatmul.mubr.f32.gmra.mxu0 %v311
      %v382 = vpop.f32.mrf.mxu0
      %v383 = vadd.f32 0.0, %v382
      %v384 = vpop.f32.mrf.mxu0
      %385 = vdwg.mxu0
      %v387 = vsel %vm309, %v303, 0
      %v389 = vsel %vm313, %v302, 0
      %391 = vmatprep.subr.mxu0 0.0
      %392 = vmatpush1.msra.mxu0 0.0
      %393 = vmatprep.subr.mxu0 0.0
      %394 = vmatpush1.msra.mxu0 0.0
      %395 = vmatprep.subr.mxu0 0.0
      %396 = vmatpush1.msra.mxu0 0.0
      %397 = vmatprep.subr.mxu0 0.0
      %398 = vmatpush1.msra.mxu0 0.0
      %399 = vmatprep.subr.mxu0 0.0
      %400 = vmatpush1.msra.mxu0 0.0
      %401 = vmatprep.subr.mxu0 0.0
      %402 = vmatpush1.msra.mxu0 0.0
      %403 = vmatprep.subr.mxu0 0.0
      %404 = vmatpush1.msra.mxu0 0.0
      %405 = vmatprep.subr.mxu0 0.0
      %406 = vmatpush1.msra.mxu0 0.0
      %407 = vmatprep.subr.mxu0 0.0
      %408 = vmatpush1.msra.mxu0 0.0
      %409 = vmatprep.subr.mxu0 0.0
      %410 = vmatpush1.msra.mxu0 0.0
      %411 = vmatprep.subr.mxu0 0.0
      %412 = vmatpush1.msra.mxu0 0.0
      %413 = vmatprep.subr.mxu0 0.0
      %414 = vmatpush1.msra.mxu0 0.0
      %415 = vmatprep.subr.mxu0 0.0
      %416 = vmatpush1.msra.mxu0 0.0
      %417 = vmatprep.subr.mxu0 0.0
      %418 = vmatpush1.msra.mxu0 0.0
      %419 = vmatprep.subr.mxu0 0.0
      %420 = vmatpush1.msra.mxu0 0.0
      %421 = vmatprep.subr.mxu0 0.0
      %422 = vmatpush1.msra.mxu0 %v389
      %423 = vmatprep.subr.mxu0 0.0
      %424 = vmatpush2.msra.mxu0 0.0
      %425 = vmatprep.subr.mxu0 0.0
      %426 = vmatpush2.msra.mxu0 0.0
      %427 = vmatprep.subr.mxu0 0.0
      %428 = vmatpush2.msra.mxu0 0.0
      %429 = vmatprep.subr.mxu0 0.0
      %430 = vmatpush2.msra.mxu0 0.0
      %431 = vmatprep.subr.mxu0 0.0
      %432 = vmatpush2.msra.mxu0 0.0
      %433 = vmatprep.subr.mxu0 0.0
      %434 = vmatpush2.msra.mxu0 0.0
      %435 = vmatprep.subr.mxu0 0.0
      %436 = vmatpush2.msra.mxu0 0.0
      %437 = vmatprep.subr.mxu0 0.0
      %438 = vmatpush2.msra.mxu0 0.0
      %439 = vmatprep.subr.mxu0 0.0
      %440 = vmatpush2.msra.mxu0 0.0
      %441 = vmatprep.subr.mxu0 0.0
      %442 = vmatpush2.msra.mxu0 0.0
      %443 = vmatprep.subr.mxu0 0.0
      %444 = vmatpush2.msra.mxu0 0.0
      %445 = vmatprep.subr.mxu0 0.0
      %446 = vmatpush2.msra.mxu0 0.0
      %447 = vmatprep.subr.mxu0 0.0
      %448 = vmatpush2.msra.mxu0 0.0
      %449 = vmatprep.subr.mxu0 0.0
      %450 = vmatpush2.msra.mxu0 0.0
      %451 = vmatprep.subr.mxu0 0.0
      %452 = vmatpush2.msra.mxu0 0.0
      %453 = vmatprep.subr.mxu0 0.0
      %454 = vmatpush2.msra.mxu0 0.0
      %455 = vmatprep.mubr.f32.mxu0 0.0
      %456 = vmatmul.mubr.f32.gmra.mxu0 %v387
      %v457 = vpop.f32.mrf.mxu0
      %v458 = vadd.f32 %v383, %v457
      %v459 = vpop.f32.mrf.mxu0
      %460 = vdwg.mxu0
      %s461 = scalar_lea.vmem %s1, 16
      %v462 = vld [vmem:[%s461] sm:$0xff]
      %463 = vrot.lane.b32.xlu0 %v302, 126
      %v464 = vpop.permute.xlu0 %463
      %v466 = vsel %vm309, %v462, 0
      %v468 = vsel %vm313, %v464, 0
      %470 = vmatprep.subr.mxu0 0.0
      %471 = vmatpush1.msra.mxu0 0.0
      %472 = vmatprep.subr.mxu0 0.0
      %473 = vmatpush1.msra.mxu0 0.0
      %474 = vmatprep.subr.mxu0 0.0
      %475 = vmatpush1.msra.mxu0 0.0
      %476 = vmatprep.subr.mxu0 0.0
      %477 = vmatpush1.msra.mxu0 0.0
      %478 = vmatprep.subr.mxu0 0.0
      %479 = vmatpush1.msra.mxu0 0.0
      %480 = vmatprep.subr.mxu0 0.0
      %481 = vmatpush1.msra.mxu0 0.0
      %482 = vmatprep.subr.mxu0 0.0
      %483 = vmatpush1.msra.mxu0 0.0
      %484 = vmatprep.subr.mxu0 0.0
      %485 = vmatpush1.msra.mxu0 0.0
      %486 = vmatprep.subr.mxu0 0.0
      %487 = vmatpush1.msra.mxu0 0.0
      %488 = vmatprep.subr.mxu0 0.0
      %489 = vmatpush1.msra.mxu0 0.0
      %490 = vmatprep.subr.mxu0 0.0
      %491 = vmatpush1.msra.mxu0 0.0
      %492 = vmatprep.subr.mxu0 0.0
      %493 = vmatpush1.msra.mxu0 0.0
      %494 = vmatprep.subr.mxu0 0.0
      %495 = vmatpush1.msra.mxu0 0.0
      %496 = vmatprep.subr.mxu0 0.0
      %497 = vmatpush1.msra.mxu0 0.0
      %498 = vmatprep.subr.mxu0 0.0
      %499 = vmatpush1.msra.mxu0 0.0
      %500 = vmatprep.subr.mxu0 0.0
      %501 = vmatpush1.msra.mxu0 %v468
      %502 = vmatprep.subr.mxu0 0.0
      %503 = vmatpush2.msra.mxu0 0.0
      %504 = vmatprep.subr.mxu0 0.0
      %505 = vmatpush2.msra.mxu0 0.0
      %506 = vmatprep.subr.mxu0 0.0
      %507 = vmatpush2.msra.mxu0 0.0
      %508 = vmatprep.subr.mxu0 0.0
      %509 = vmatpush2.msra.mxu0 0.0
      %510 = vmatprep.subr.mxu0 0.0
      %511 = vmatpush2.msra.mxu0 0.0
      %512 = vmatprep.subr.mxu0 0.0
      %513 = vmatpush2.msra.mxu0 0.0
      %514 = vmatprep.subr.mxu0 0.0
      %515 = vmatpush2.msra.mxu0 0.0
      %516 = vmatprep.subr.mxu0 0.0
      %517 = vmatpush2.msra.mxu0 0.0
      %518 = vmatprep.subr.mxu0 0.0
      %519 = vmatpush2.msra.mxu0 0.0
      %520 = vmatprep.subr.mxu0 0.0
      %521 = vmatpush2.msra.mxu0 0.0
      %522 = vmatprep.subr.mxu0 0.0
      %523 = vmatpush2.msra.mxu0 0.0
      %524 = vmatprep.subr.mxu0 0.0
      %525 = vmatpush2.msra.mxu0 0.0
      %526 = vmatprep.subr.mxu0 0.0
      %527 = vmatpush2.msra.mxu0 0.0
      %528 = vmatprep.subr.mxu0 0.0
      %529 = vmatpush2.msra.mxu0 0.0
      %530 = vmatprep.subr.mxu0 0.0
      %531 = vmatpush2.msra.mxu0 0.0
      %532 = vmatprep.subr.mxu0 0.0
      %533 = vmatpush2.msra.mxu0 0.0
      %534 = vmatprep.mubr.f32.mxu0 0.0
      %535 = vmatmul.mubr.f32.gmra.mxu0 %v466
      %v536 = vpop.f32.mrf.mxu0
      %v537 = vadd.f32 0.0, %v536
      %v538 = vpop.f32.mrf.mxu0
      %539 = vdwg.mxu0
      %v540 = vadd.f32 %v458, %v537
      %s541 = scalar_lea.vmem %s1, 24
      %v542 = vld [vmem:[%s541] sm:$0xff]
      %543 = vrot.lane.b32.xlu0 %v302, 118
      %v544 = vpop.permute.xlu0 %543
      %v546 = vsel %vm309, %v542, 0
      %v548 = vsel %vm313, %v544, 0
      %550 = vmatprep.subr.mxu0 0.0
      %551 = vmatpush1.msra.mxu0 0.0
      %552 = vmatprep.subr.mxu0 0.0
      %553 = vmatpush1.msra.mxu0 0.0
      %554 = vmatprep.subr.mxu0 0.0
      %555 = vmatpush1.msra.mxu0 0.0
      %556 = vmatprep.subr.mxu0 0.0
      %557 = vmatpush1.msra.mxu0 0.0
      %558 = vmatprep.subr.mxu0 0.0
      %559 = vmatpush1.msra.mxu0 0.0
      %560 = vmatprep.subr.mxu0 0.0
      %561 = vmatpush1.msra.mxu0 0.0
      %562 = vmatprep.subr.mxu0 0.0
      %563 = vmatpush1.msra.mxu0 0.0
      %564 = vmatprep.subr.mxu0 0.0
      %565 = vmatpush1.msra.mxu0 0.0
      %566 = vmatprep.subr.mxu0 0.0
      %567 = vmatpush1.msra.mxu0 0.0
      %568 = vmatprep.subr.mxu0 0.0
      %569 = vmatpush1.msra.mxu0 0.0
      %570 = vmatprep.subr.mxu0 0.0
      %571 = vmatpush1.msra.mxu0 0.0
      %572 = vmatprep.subr.mxu0 0.0
      %573 = vmatpush1.msra.mxu0 0.0
      %574 = vmatprep.subr.mxu0 0.0
      %575 = vmatpush1.msra.mxu0 0.0
      %576 = vmatprep.subr.mxu0 0.0
      %577 = vmatpush1.msra.mxu0 0.0
      %578 = vmatprep.subr.mxu0 0.0
      %579 = vmatpush1.msra.mxu0 0.0
      %580 = vmatprep.subr.mxu0 0.0
      %581 = vmatpush1.msra.mxu0 %v548
      %582 = vmatprep.subr.mxu0 0.0
      %583 = vmatpush2.msra.mxu0 0.0
      %584 = vmatprep.subr.mxu0 0.0
      %585 = vmatpush2.msra.mxu0 0.0
      %586 = vmatprep.subr.mxu0 0.0
      %587 = vmatpush2.msra.mxu0 0.0
      %588 = vmatprep.subr.mxu0 0.0
      %589 = vmatpush2.msra.mxu0 0.0
      %590 = vmatprep.subr.mxu0 0.0
      %591 = vmatpush2.msra.mxu0 0.0
      %592 = vmatprep.subr.mxu0 0.0
      %593 = vmatpush2.msra.mxu0 0.0
      %594 = vmatprep.subr.mxu0 0.0
      %595 = vmatpush2.msra.mxu0 0.0
      %596 = vmatprep.subr.mxu0 0.0
      %597 = vmatpush2.msra.mxu0 0.0
      %598 = vmatprep.subr.mxu0 0.0
      %599 = vmatpush2.msra.mxu0 0.0
      %600 = vmatprep.subr.mxu0 0.0
      %601 = vmatpush2.msra.mxu0 0.0
      %602 = vmatprep.subr.mxu0 0.0
      %603 = vmatpush2.msra.mxu0 0.0
      %604 = vmatprep.subr.mxu0 0.0
      %605 = vmatpush2.msra.mxu0 0.0
      %606 = vmatprep.subr.mxu0 0.0
      %607 = vmatpush2.msra.mxu0 0.0
      %608 = vmatprep.subr.mxu0 0.0
      %609 = vmatpush2.msra.mxu0 0.0
      %610 = vmatprep.subr.mxu0 0.0
      %611 = vmatpush2.msra.mxu0 0.0
      %612 = vmatprep.subr.mxu0 0.0
      %613 = vmatpush2.msra.mxu0 0.0
      %614 = vmatprep.mubr.f32.mxu0 0.0
      %615 = vmatmul.mubr.f32.gmra.mxu0 %v546
      %v616 = vpop.f32.mrf.mxu0
      %v617 = vadd.f32 0.0, %v616
      %v618 = vpop.f32.mrf.mxu0
      %619 = vdwg.mxu0
      %v620 = vadd.f32 %v540, %v617
      %s621 = scalar_lea.vmem %s1, 32
      %v622 = vld [vmem:[%s621] sm:$0xff]
      %623 = vrot.lane.b32.xlu0 %v302, 117
      %v624 = vpop.permute.xlu0 %623
      %v626 = vsel %vm309, %v622, 0
      %v628 = vsel %vm313, %v624, 0
      %630 = vmatprep.subr.mxu0 0.0
      %631 = vmatpush1.msra.mxu0 0.0
      %632 = vmatprep.subr.mxu0 0.0
      %633 = vmatpush1.msra.mxu0 0.0
      %634 = vmatprep.subr.mxu0 0.0
      %635 = vmatpush1.msra.mxu0 0.0
      %636 = vmatprep.subr.mxu0 0.0
      %637 = vmatpush1.msra.mxu0 0.0
      %638 = vmatprep.subr.mxu0 0.0
      %639 = vmatpush1.msra.mxu0 0.0
      %640 = vmatprep.subr.mxu0 0.0
      %641 = vmatpush1.msra.mxu0 0.0
      %642 = vmatprep.subr.mxu0 0.0
      %643 = vmatpush1.msra.mxu0 0.0
      %644 = vmatprep.subr.mxu0 0.0
      %645 = vmatpush1.msra.mxu0 0.0
      %646 = vmatprep.subr.mxu0 0.0
      %647 = vmatpush1.msra.mxu0 0.0
      %648 = vmatprep.subr.mxu0 0.0
      %649 = vmatpush1.msra.mxu0 0.0
      %650 = vmatprep.subr.mxu0 0.0
      %651 = vmatpush1.msra.mxu0 0.0
      %652 = vmatprep.subr.mxu0 0.0
      %653 = vmatpush1.msra.mxu0 0.0
      %654 = vmatprep.subr.mxu0 0.0
      %655 = vmatpush1.msra.mxu0 0.0
      %656 = vmatprep.subr.mxu0 0.0
      %657 = vmatpush1.msra.mxu0 0.0
      %658 = vmatprep.subr.mxu0 0.0
      %659 = vmatpush1.msra.mxu0 0.0
      %660 = vmatprep.subr.mxu0 0.0
      %661 = vmatpush1.msra.mxu0 %v628
      %662 = vmatprep.subr.mxu0 0.0
      %663 = vmatpush2.msra.mxu0 0.0
      %664 = vmatprep.subr.mxu0 0.0
      %665 = vmatpush2.msra.mxu0 0.0
      %666 = vmatprep.subr.mxu0 0.0
      %667 = vmatpush2.msra.mxu0 0.0
      %668 = vmatprep.subr.mxu0 0.0
      %669 = vmatpush2.msra.mxu0 0.0
      %670 = vmatprep.subr.mxu0 0.0
      %671 = vmatpush2.msra.mxu0 0.0
      %672 = vmatprep.subr.mxu0 0.0
      %673 = vmatpush2.msra.mxu0 0.0
      %674 = vmatprep.subr.mxu0 0.0
      %675 = vmatpush2.msra.mxu0 0.0
      %676 = vmatprep.subr.mxu0 0.0
      %677 = vmatpush2.msra.mxu0 0.0
      %678 = vmatprep.subr.mxu0 0.0
      %679 = vmatpush2.msra.mxu0 0.0
      %680 = vmatprep.subr.mxu0 0.0
      %681 = vmatpush2.msra.mxu0 0.0
      %682 = vmatprep.subr.mxu0 0.0
      %683 = vmatpush2.msra.mxu0 0.0
      %684 = vmatprep.subr.mxu0 0.0
      %685 = vmatpush2.msra.mxu0 0.0
      %686 = vmatprep.subr.mxu0 0.0
      %687 = vmatpush2.msra.mxu0 0.0
      %688 = vmatprep.subr.mxu0 0.0
      %689 = vmatpush2.msra.mxu0 0.0
      %690 = vmatprep.subr.mxu0 0.0
      %691 = vmatpush2.msra.mxu0 0.0
      %692 = vmatprep.subr.mxu0 0.0
      %693 = vmatpush2.msra.mxu0 0.0
      %694 = vmatprep.mubr.f32.mxu0 0.0
      %695 = vmatmul.mubr.f32.gmra.mxu0 %v626
      %v696 = vpop.f32.mrf.mxu0
      %v697 = vadd.f32 0.0, %v696
      %v698 = vpop.f32.mrf.mxu0
      %699 = vdwg.mxu0
      %v700 = vadd.f32 %v620, %v697
      %s701 = scalar_lea.vmem %s1, 40
      %v702 = vld [vmem:[%s701] sm:$0xff]
      %703 = vrot.lane.b32.xlu0 %v302, 116
      %v704 = vpop.permute.xlu0 %703
      %v706 = vsel %vm309, %v702, 0
      %v708 = vsel %vm313, %v704, 0
      %710 = vmatprep.subr.mxu0 0.0
      %711 = vmatpush1.msra.mxu0 0.0
      %712 = vmatprep.subr.mxu0 0.0
      %713 = vmatpush1.msra.mxu0 0.0
      %714 = vmatprep.subr.mxu0 0.0
      %715 = vmatpush1.msra.mxu0 0.0
      %716 = vmatprep.subr.mxu0 0.0
      %717 = vmatpush1.msra.mxu0 0.0
      %718 = vmatprep.subr.mxu0 0.0
      %719 = vmatpush1.msra.mxu0 0.0
      %720 = vmatprep.subr.mxu0 0.0
      %721 = vmatpush1.msra.mxu0 0.0
      %722 = vmatprep.subr.mxu0 0.0
      %723 = vmatpush1.msra.mxu0 0.0
      %724 = vmatprep.subr.mxu0 0.0
      %725 = vmatpush1.msra.mxu0 0.0
      %726 = vmatprep.subr.mxu0 0.0
      %727 = vmatpush1.msra.mxu0 0.0
      %728 = vmatprep.subr.mxu0 0.0
      %729 = vmatpush1.msra.mxu0 0.0
      %730 = vmatprep.subr.mxu0 0.0
      %731 = vmatpush1.msra.mxu0 0.0
      %732 = vmatprep.subr.mxu0 0.0
      %733 = vmatpush1.msra.mxu0 0.0
      %734 = vmatprep.subr.mxu0 0.0
      %735 = vmatpush1.msra.mxu0 0.0
      %736 = vmatprep.subr.mxu0 0.0
      %737 = vmatpush1.msra.mxu0 0.0
      %738 = vmatprep.subr.mxu0 0.0
      %739 = vmatpush1.msra.mxu0 0.0
      %740 = vmatprep.subr.mxu0 0.0
      %741 = vmatpush1.msra.mxu0 %v708
      %742 = vmatprep.subr.mxu0 0.0
      %743 = vmatpush2.msra.mxu0 0.0
      %744 = vmatprep.subr.mxu0 0.0
      %745 = vmatpush2.msra.mxu0 0.0
      %746 = vmatprep.subr.mxu0 0.0
      %747 = vmatpush2.msra.mxu0 0.0
      %748 = vmatprep.subr.mxu0 0.0
      %749 = vmatpush2.msra.mxu0 0.0
      %750 = vmatprep.subr.mxu0 0.0
      %751 = vmatpush2.msra.mxu0 0.0
      %752 = vmatprep.subr.mxu0 0.0
      %753 = vmatpush2.msra.mxu0 0.0
      %754 = vmatprep.subr.mxu0 0.0
      %755 = vmatpush2.msra.mxu0 0.0
      %756 = vmatprep.subr.mxu0 0.0
      %757 = vmatpush2.msra.mxu0 0.0
      %758 = vmatprep.subr.mxu0 0.0
      %759 = vmatpush2.msra.mxu0 0.0
      %760 = vmatprep.subr.mxu0 0.0
      %761 = vmatpush2.msra.mxu0 0.0
      %762 = vmatprep.subr.mxu0 0.0
      %763 = vmatpush2.msra.mxu0 0.0
      %764 = vmatprep.subr.mxu0 0.0
      %765 = vmatpush2.msra.mxu0 0.0
      %766 = vmatprep.subr.mxu0 0.0
      %767 = vmatpush2.msra.mxu0 0.0
      %768 = vmatprep.subr.mxu0 0.0
      %769 = vmatpush2.msra.mxu0 0.0
      %770 = vmatprep.subr.mxu0 0.0
      %771 = vmatpush2.msra.mxu0 0.0
      %772 = vmatprep.subr.mxu0 0.0
      %773 = vmatpush2.msra.mxu0 0.0
      %774 = vmatprep.mubr.f32.mxu0 0.0
      %775 = vmatmul.mubr.f32.gmra.mxu0 %v706
      %v776 = vpop.f32.mrf.mxu0
      %v777 = vadd.f32 0.0, %v776
      %v778 = vpop.f32.mrf.mxu0
      %779 = vdwg.mxu0
      %v780 = vadd.f32 %v700, %v777
      %s781 = scalar_lea.vmem %s1, 48
      %v782 = vld [vmem:[%s781] sm:$0xff]
      %783 = vrot.lane.b32.xlu0 %v302, 108
      %v784 = vpop.permute.xlu0 %783
      %v786 = vsel %vm309, %v782, 0
      %v788 = vsel %vm313, %v784, 0
      %790 = vmatprep.subr.mxu0 0.0
      %791 = vmatpush1.msra.mxu0 0.0
      %792 = vmatprep.subr.mxu0 0.0
      %793 = vmatpush1.msra.mxu0 0.0
      %794 = vmatprep.subr.mxu0 0.0
      %795 = vmatpush1.msra.mxu0 0.0
      %796 = vmatprep.subr.mxu0 0.0
      %797 = vmatpush1.msra.mxu0 0.0
      %798 = vmatprep.subr.mxu0 0.0
      %799 = vmatpush1.msra.mxu0 0.0
      %800 = vmatprep.subr.mxu0 0.0
      %801 = vmatpush1.msra.mxu0 0.0
      %802 = vmatprep.subr.mxu0 0.0
      %803 = vmatpush1.msra.mxu0 0.0
      %804 = vmatprep.subr.mxu0 0.0
      %805 = vmatpush1.msra.mxu0 0.0
      %806 = vmatprep.subr.mxu0 0.0
      %807 = vmatpush1.msra.mxu0 0.0
      %808 = vmatprep.subr.mxu0 0.0
      %809 = vmatpush1.msra.mxu0 0.0
      %810 = vmatprep.subr.mxu0 0.0
      %811 = vmatpush1.msra.mxu0 0.0
      %812 = vmatprep.subr.mxu0 0.0
      %813 = vmatpush1.msra.mxu0 0.0
      %814 = vmatprep.subr.mxu0 0.0
      %815 = vmatpush1.msra.mxu0 0.0
      %816 = vmatprep.subr.mxu0 0.0
      %817 = vmatpush1.msra.mxu0 0.0
      %818 = vmatprep.subr.mxu0 0.0
      %819 = vmatpush1.msra.mxu0 0.0
      %820 = vmatprep.subr.mxu0 0.0
      %821 = vmatpush1.msra.mxu0 %v788
      %822 = vmatprep.subr.mxu0 0.0
      %823 = vmatpush2.msra.mxu0 0.0
      %824 = vmatprep.subr.mxu0 0.0
      %825 = vmatpush2.msra.mxu0 0.0
      %826 = vmatprep.subr.mxu0 0.0
      %827 = vmatpush2.msra.mxu0 0.0
      %828 = vmatprep.subr.mxu0 0.0
      %829 = vmatpush2.msra.mxu0 0.0
      %830 = vmatprep.subr.mxu0 0.0
      %831 = vmatpush2.msra.mxu0 0.0
      %832 = vmatprep.subr.mxu0 0.0
      %833 = vmatpush2.msra.mxu0 0.0
      %834 = vmatprep.subr.mxu0 0.0
      %835 = vmatpush2.msra.mxu0 0.0
      %836 = vmatprep.subr.mxu0 0.0
      %837 = vmatpush2.msra.mxu0 0.0
      %838 = vmatprep.subr.mxu0 0.0
      %839 = vmatpush2.msra.mxu0 0.0
      %840 = vmatprep.subr.mxu0 0.0
      %841 = vmatpush2.msra.mxu0 0.0
      %842 = vmatprep.subr.mxu0 0.0
      %843 = vmatpush2.msra.mxu0 0.0
      %844 = vmatprep.subr.mxu0 0.0
      %845 = vmatpush2.msra.mxu0 0.0
      %846 = vmatprep.subr.mxu0 0.0
      %847 = vmatpush2.msra.mxu0 0.0
      %848 = vmatprep.subr.mxu0 0.0
      %849 = vmatpush2.msra.mxu0 0.0
      %850 = vmatprep.subr.mxu0 0.0
      %851 = vmatpush2.msra.mxu0 0.0
      %852 = vmatprep.subr.mxu0 0.0
      %853 = vmatpush2.msra.mxu0 0.0
      %854 = vmatprep.mubr.f32.mxu0 0.0
      %855 = vmatmul.mubr.f32.gmra.mxu0 %v786
      %v856 = vpop.f32.mrf.mxu0
      %v857 = vadd.f32 0.0, %v856
      %v858 = vpop.f32.mrf.mxu0
      %859 = vdwg.mxu0
      %v860 = vadd.f32 %v780, %v857
      %s861 = scalar_lea.vmem %s1, 56
      %v862 = vld [vmem:[%s861] sm:$0xff]
      %863 = vrot.lane.b32.xlu0 %v302, 107
      %v864 = vpop.permute.xlu0 %863
      %v866 = vsel %vm309, %v862, 0
      %v868 = vsel %vm313, %v864, 0
      %870 = vmatprep.subr.mxu0 0.0
      %871 = vmatpush1.msra.mxu0 0.0
      %872 = vmatprep.subr.mxu0 0.0
      %873 = vmatpush1.msra.mxu0 0.0
      %874 = vmatprep.subr.mxu0 0.0
      %875 = vmatpush1.msra.mxu0 0.0
      %876 = vmatprep.subr.mxu0 0.0
      %877 = vmatpush1.msra.mxu0 0.0
      %878 = vmatprep.subr.mxu0 0.0
      %879 = vmatpush1.msra.mxu0 0.0
      %880 = vmatprep.subr.mxu0 0.0
      %881 = vmatpush1.msra.mxu0 0.0
      %882 = vmatprep.subr.mxu0 0.0
      %883 = vmatpush1.msra.mxu0 0.0
      %884 = vmatprep.subr.mxu0 0.0
      %885 = vmatpush1.msra.mxu0 0.0
      %886 = vmatprep.subr.mxu0 0.0
      %887 = vmatpush1.msra.mxu0 0.0
      %888 = vmatprep.subr.mxu0 0.0
      %889 = vmatpush1.msra.mxu0 0.0
      %890 = vmatprep.subr.mxu0 0.0
      %891 = vmatpush1.msra.mxu0 0.0
      %892 = vmatprep.subr.mxu0 0.0
      %893 = vmatpush1.msra.mxu0 0.0
      %894 = vmatprep.subr.mxu0 0.0
      %895 = vmatpush1.msra.mxu0 0.0
      %896 = vmatprep.subr.mxu0 0.0
      %897 = vmatpush1.msra.mxu0 0.0
      %898 = vmatprep.subr.mxu0 0.0
      %899 = vmatpush1.msra.mxu0 0.0
      %900 = vmatprep.subr.mxu0 0.0
      %901 = vmatpush1.msra.mxu0 %v868
      %902 = vmatprep.subr.mxu0 0.0
      %903 = vmatpush2.msra.mxu0 0.0
      %904 = vmatprep.subr.mxu0 0.0
      %905 = vmatpush2.msra.mxu0 0.0
      %906 = vmatprep.subr.mxu0 0.0
      %907 = vmatpush2.msra.mxu0 0.0
      %908 = vmatprep.subr.mxu0 0.0
      %909 = vmatpush2.msra.mxu0 0.0
      %910 = vmatprep.subr.mxu0 0.0
      %911 = vmatpush2.msra.mxu0 0.0
      %912 = vmatprep.subr.mxu0 0.0
      %913 = vmatpush2.msra.mxu0 0.0
      %914 = vmatprep.subr.mxu0 0.0
      %915 = vmatpush2.msra.mxu0 0.0
      %916 = vmatprep.subr.mxu0 0.0
      %917 = vmatpush2.msra.mxu0 0.0
      %918 = vmatprep.subr.mxu0 0.0
      %919 = vmatpush2.msra.mxu0 0.0
      %920 = vmatprep.subr.mxu0 0.0
      %921 = vmatpush2.msra.mxu0 0.0
      %922 = vmatprep.subr.mxu0 0.0
      %923 = vmatpush2.msra.mxu0 0.0
      %924 = vmatprep.subr.mxu0 0.0
      %925 = vmatpush2.msra.mxu0 0.0
      %926 = vmatprep.subr.mxu0 0.0
      %927 = vmatpush2.msra.mxu0 0.0
      %928 = vmatprep.subr.mxu0 0.0
      %929 = vmatpush2.msra.mxu0 0.0
      %930 = vmatprep.subr.mxu0 0.0
      %931 = vmatpush2.msra.mxu0 0.0
      %932 = vmatprep.subr.mxu0 0.0
      %933 = vmatpush2.msra.mxu0 0.0
      %934 = vmatprep.mubr.f32.mxu0 0.0
      %935 = vmatmul.mubr.f32.gmra.mxu0 %v866
      %v936 = vpop.f32.mrf.mxu0
      %v937 = vadd.f32 0.0, %v936
      %v938 = vpop.f32.mrf.mxu0
      %939 = vdwg.mxu0
      %v940 = vadd.f32 %v860, %v937
      %s941 = scalar_lea.vmem %s1, 64
      %v942 = vld [vmem:[%s941] sm:$0xff]
      %943 = vrot.lane.b32.xlu0 %v302, 106
      %v944 = vpop.permute.xlu0 %943
      %v946 = vsel %vm309, %v942, 0
      %v948 = vsel %vm313, %v944, 0
      %950 = vmatprep.subr.mxu0 0.0
      %951 = vmatpush1.msra.mxu0 0.0
      %952 = vmatprep.subr.mxu0 0.0
      %953 = vmatpush1.msra.mxu0 0.0
      %954 = vmatprep.subr.mxu0 0.0
      %955 = vmatpush1.msra.mxu0 0.0
      %956 = vmatprep.subr.mxu0 0.0
      %957 = vmatpush1.msra.mxu0 0.0
      %958 = vmatprep.subr.mxu0 0.0
      %959 = vmatpush1.msra.mxu0 0.0
      %960 = vmatprep.subr.mxu0 0.0
      %961 = vmatpush1.msra.mxu0 0.0
      %962 = vmatprep.subr.mxu0 0.0
      %963 = vmatpush1.msra.mxu0 0.0
      %964 = vmatprep.subr.mxu0 0.0
      %965 = vmatpush1.msra.mxu0 0.0
      %966 = vmatprep.subr.mxu0 0.0
      %967 = vmatpush1.msra.mxu0 0.0
      %968 = vmatprep.subr.mxu0 0.0
      %969 = vmatpush1.msra.mxu0 0.0
      %970 = vmatprep.subr.mxu0 0.0
      %971 = vmatpush1.msra.mxu0 0.0
      %972 = vmatprep.subr.mxu0 0.0
      %973 = vmatpush1.msra.mxu0 0.0
      %974 = vmatprep.subr.mxu0 0.0
      %975 = vmatpush1.msra.mxu0 0.0
      %976 = vmatprep.subr.mxu0 0.0
      %977 = vmatpush1.msra.mxu0 0.0
      %978 = vmatprep.subr.mxu0 0.0
      %979 = vmatpush1.msra.mxu0 0.0
      %980 = vmatprep.subr.mxu0 0.0
      %981 = vmatpush1.msra.mxu0 %v948
      %982 = vmatprep.subr.mxu0 0.0
      %983 = vmatpush2.msra.mxu0 0.0
      %984 = vmatprep.subr.mxu0 0.0
      %985 = vmatpush2.msra.mxu0 0.0
      %986 = vmatprep.subr.mxu0 0.0
      %987 = vmatpush2.msra.mxu0 0.0
      %988 = vmatprep.subr.mxu0 0.0
      %989 = vmatpush2.msra.mxu0 0.0
      %990 = vmatprep.subr.mxu0 0.0
      %991 = vmatpush2.msra.mxu0 0.0
      %992 = vmatprep.subr.mxu0 0.0
      %993 = vmatpush2.msra.mxu0 0.0
      %994 = vmatprep.subr.mxu0 0.0
      %995 = vmatpush2.msra.mxu0 0.0
      %996 = vmatprep.subr.mxu0 0.0
      %997 = vmatpush2.msra.mxu0 0.0
      %998 = vmatprep.subr.mxu0 0.0
      %999 = vmatpush2.msra.mxu0 0.0
      %1000 = vmatprep.subr.mxu0 0.0
      %1001 = vmatpush2.msra.mxu0 0.0
      %1002 = vmatprep.subr.mxu0 0.0
      %1003 = vmatpush2.msra.mxu0 0.0
      %1004 = vmatprep.subr.mxu0 0.0
      %1005 = vmatpush2.msra.mxu0 0.0
      %1006 = vmatprep.subr.mxu0 0.0
      %1007 = vmatpush2.msra.mxu0 0.0
      %1008 = vmatprep.subr.mxu0 0.0
      %1009 = vmatpush2.msra.mxu0 0.0
      %1010 = vmatprep.subr.mxu0 0.0
      %1011 = vmatpush2.msra.mxu0 0.0
      %1012 = vmatprep.subr.mxu0 0.0
      %1013 = vmatpush2.msra.mxu0 0.0
      %1014 = vmatprep.mubr.f32.mxu0 0.0
      %1015 = vmatmul.mubr.f32.gmra.mxu0 %v946
      %v1016 = vpop.f32.mrf.mxu0
      %v1017 = vadd.f32 0.0, %v1016
      %v1018 = vpop.f32.mrf.mxu0
      %1019 = vdwg.mxu0
      %v1020 = vadd.f32 %v940, %v1017
      %v1021 = vld [vmem:[%s2] sm:$0xff]
      %1023 = vset.pattern.permute.xlu0 0
      %1024 = vperm.xlu0 %1023, %v1021
      %v1025 = vpop.permute.xlu0 %1024
      %v1027 = vmul.f32 %v1020, %v1025
      %v1028 = vld [vmem:[%s3] sm:$0xff]
      %1030 = vset.pattern.permute.xlu0 0
      %1031 = vperm.xlu0 %1030, %v1028
      %v1032 = vpop.permute.xlu0 %1031
      %v1034 = vadd.f32 %v1027, %v1032
      %v1035 = vmax.f32 %v1034, 0.0
      %v1037 = vlaneseq
      %v1038 = vshrl.u32 %v1037, 7
      %v1039 = vsub.s32 0, %v1038
      %v1040 = vrot.slane %v301, %v1039
      %v1042 = vmul.f32 %v1035, %v1040
      %vm1043 = vcmask 818176
      %1044 = vst.msk [vmem:[#allocation2] sm:$0xff] %vm1043, 0.0
      %1046 = vrot.lane.b32.xlu0 %v1042, 11
      %v1047 = vpop.permute.xlu0 %1046
      %vm1049 = vcmask 728152
      %1050 = vst.msk [vmem:[#allocation2] sm:$0xff] %vm1049, %v1047
      %v1051 = vld [vmem:[#allocation2] sm:$0xff]
      %v1052 = vld [vmem:[%s4] sm:$0xff]
      %s1053 = scalar_lea.vmem %s4, 8
      %v1054 = vld [vmem:[%s1053] sm:$0xff]
      %1056 = vrot.lane.b32.xlu0 %v1051, 127
      %v1057 = vpop.permute.xlu0 %1056
      %vm1059 = vcmask 64512
      %v1061 = vsel %vm1059, %v1054, 0
      %1063 = vmatprep.subr.mxu0 0.0
      %1064 = vmatpush1.msra.mxu0 0.0
      %1065 = vmatprep.subr.mxu0 0.0
      %1066 = vmatpush1.msra.mxu0 0.0
      %1067 = vmatprep.subr.mxu0 0.0
      %1068 = vmatpush1.msra.mxu0 0.0
      %1069 = vmatprep.subr.mxu0 0.0
      %1070 = vmatpush1.msra.mxu0 0.0
      %1071 = vmatprep.subr.mxu0 0.0
      %1072 = vmatpush1.msra.mxu0 0.0
      %1073 = vmatprep.subr.mxu0 0.0
      %1074 = vmatpush1.msra.mxu0 0.0
      %1075 = vmatprep.subr.mxu0 0.0
      %1076 = vmatpush1.msra.mxu0 0.0
      %1077 = vmatprep.subr.mxu0 0.0
      %1078 = vmatpush1.msra.mxu0 0.0
      %1079 = vmatprep.subr.mxu0 0.0
      %1080 = vmatpush1.msra.mxu0 0.0
      %1081 = vmatprep.subr.mxu0 0.0
      %1082 = vmatpush1.msra.mxu0 0.0
      %1083 = vmatprep.subr.mxu0 0.0
      %1084 = vmatpush1.msra.mxu0 0.0
      %1085 = vmatprep.subr.mxu0 0.0
      %1086 = vmatpush1.msra.mxu0 0.0
      %1087 = vmatprep.subr.mxu0 0.0
      %1088 = vmatpush1.msra.mxu0 0.0
      %1089 = vmatprep.subr.mxu0 0.0
      %1090 = vmatpush1.msra.mxu0 0.0
      %1091 = vmatprep.subr.mxu0 0.0
      %1092 = vmatpush1.msra.mxu0 0.0
      %1093 = vmatprep.subr.mxu0 0.0
      %1094 = vmatpush1.msra.mxu0 %v1057
      %1095 = vmatprep.subr.mxu0 0.0
      %1096 = vmatpush2.msra.mxu0 0.0
      %1097 = vmatprep.subr.mxu0 0.0
      %1098 = vmatpush2.msra.mxu0 0.0
      %1099 = vmatprep.subr.mxu0 0.0
      %1100 = vmatpush2.msra.mxu0 0.0
      %1101 = vmatprep.subr.mxu0 0.0
      %1102 = vmatpush2.msra.mxu0 0.0
      %1103 = vmatprep.subr.mxu0 0.0
      %1104 = vmatpush2.msra.mxu0 0.0
      %1105 = vmatprep.subr.mxu0 0.0
      %1106 = vmatpush2.msra.mxu0 0.0
      %1107 = vmatprep.subr.mxu0 0.0
      %1108 = vmatpush2.msra.mxu0 0.0
      %1109 = vmatprep.subr.mxu0 0.0
      %1110 = vmatpush2.msra.mxu0 0.0
      %1111 = vmatprep.subr.mxu0 0.0
      %1112 = vmatpush2.msra.mxu0 0.0
      %1113 = vmatprep.subr.mxu0 0.0
      %1114 = vmatpush2.msra.mxu0 0.0
      %1115 = vmatprep.subr.mxu0 0.0
      %1116 = vmatpush2.msra.mxu0 0.0
      %1117 = vmatprep.subr.mxu0 0.0
      %1118 = vmatpush2.msra.mxu0 0.0
      %1119 = vmatprep.subr.mxu0 0.0
      %1120 = vmatpush2.msra.mxu0 0.0
      %1121 = vmatprep.subr.mxu0 0.0
      %1122 = vmatpush2.msra.mxu0 0.0
      %1123 = vmatprep.subr.mxu0 0.0
      %1124 = vmatpush2.msra.mxu0 0.0
      %1125 = vmatprep.subr.mxu0 0.0
      %1126 = vmatpush2.msra.mxu0 0.0
      %1127 = vmatprep.mubr.f32.mxu0 0.0
      %1128 = vmatmul.mubr.f32.gmra.mxu0 %v1061
      %v1129 = vpop.f32.mrf.mxu0
      %v1130 = vadd.f32 0.0, %v1129
      %v1131 = vpop.f32.mrf.mxu0
      %1132 = vdwg.mxu0
      %v1134 = vsel %vm1059, %v1052, 0
      %1136 = vmatprep.subr.mxu0 0.0
      %1137 = vmatpush1.msra.mxu0 0.0
      %1138 = vmatprep.subr.mxu0 0.0
      %1139 = vmatpush1.msra.mxu0 0.0
      %1140 = vmatprep.subr.mxu0 0.0
      %1141 = vmatpush1.msra.mxu0 0.0
      %1142 = vmatprep.subr.mxu0 0.0
      %1143 = vmatpush1.msra.mxu0 0.0
      %1144 = vmatprep.subr.mxu0 0.0
      %1145 = vmatpush1.msra.mxu0 0.0
      %1146 = vmatprep.subr.mxu0 0.0
      %1147 = vmatpush1.msra.mxu0 0.0
      %1148 = vmatprep.subr.mxu0 0.0
      %1149 = vmatpush1.msra.mxu0 0.0
      %1150 = vmatprep.subr.mxu0 0.0
      %1151 = vmatpush1.msra.mxu0 0.0
      %1152 = vmatprep.subr.mxu0 0.0
      %1153 = vmatpush1.msra.mxu0 0.0
      %1154 = vmatprep.subr.mxu0 0.0
      %1155 = vmatpush1.msra.mxu0 0.0
      %1156 = vmatprep.subr.mxu0 0.0
      %1157 = vmatpush1.msra.mxu0 0.0
      %1158 = vmatprep.subr.mxu0 0.0
      %1159 = vmatpush1.msra.mxu0 0.0
      %1160 = vmatprep.subr.mxu0 0.0
      %1161 = vmatpush1.msra.mxu0 0.0
      %1162 = vmatprep.subr.mxu0 0.0
      %1163 = vmatpush1.msra.mxu0 0.0
      %1164 = vmatprep.subr.mxu0 0.0
      %1165 = vmatpush1.msra.mxu0 0.0
      %1166 = vmatprep.subr.mxu0 0.0
      %1167 = vmatpush1.msra.mxu0 %v1051
      %1168 = vmatprep.subr.mxu0 0.0
      %1169 = vmatpush2.msra.mxu0 0.0
      %1170 = vmatprep.subr.mxu0 0.0
      %1171 = vmatpush2.msra.mxu0 0.0
      %1172 = vmatprep.subr.mxu0 0.0
      %1173 = vmatpush2.msra.mxu0 0.0
      %1174 = vmatprep.subr.mxu0 0.0
      %1175 = vmatpush2.msra.mxu0 0.0
      %1176 = vmatprep.subr.mxu0 0.0
      %1177 = vmatpush2.msra.mxu0 0.0
      %1178 = vmatprep.subr.mxu0 0.0
      %1179 = vmatpush2.msra.mxu0 0.0
      %1180 = vmatprep.subr.mxu0 0.0
      %1181 = vmatpush2.msra.mxu0 0.0
      %1182 = vmatprep.subr.mxu0 0.0
      %1183 = vmatpush2.msra.mxu0 0.0
      %1184 = vmatprep.subr.mxu0 0.0
      %1185 = vmatpush2.msra.mxu0 0.0
      %1186 = vmatprep.subr.mxu0 0.0
      %1187 = vmatpush2.msra.mxu0 0.0
      %1188 = vmatprep.subr.mxu0 0.0
      %1189 = vmatpush2.msra.mxu0 0.0
      %1190 = vmatprep.subr.mxu0 0.0
      %1191 = vmatpush2.msra.mxu0 0.0
      %1192 = vmatprep.subr.mxu0 0.0
      %1193 = vmatpush2.msra.mxu0 0.0
      %1194 = vmatprep.subr.mxu0 0.0
      %1195 = vmatpush2.msra.mxu0 0.0
      %1196 = vmatprep.subr.mxu0 0.0
      %1197 = vmatpush2.msra.mxu0 0.0
      %1198 = vmatprep.subr.mxu0 0.0
      %1199 = vmatpush2.msra.mxu0 0.0
      %1200 = vmatprep.mubr.f32.mxu0 0.0
      %1201 = vmatmul.mubr.f32.gmra.mxu0 %v1134
      %v1202 = vpop.f32.mrf.mxu0
      %v1203 = vadd.f32 %v1130, %v1202
      %v1204 = vpop.f32.mrf.mxu0
      %1205 = vdwg.mxu0
      %s1206 = scalar_lea.vmem %s4, 16
      %v1207 = vld [vmem:[%s1206] sm:$0xff]
      %1208 = vrot.lane.b32.xlu0 %v1051, 126
      %v1209 = vpop.permute.xlu0 %1208
      %v1212 = vsel %vm1059, %v1207, 0
      %1214 = vmatprep.subr.mxu0 0.0
      %1215 = vmatpush1.msra.mxu0 0.0
      %1216 = vmatprep.subr.mxu0 0.0
      %1217 = vmatpush1.msra.mxu0 0.0
      %1218 = vmatprep.subr.mxu0 0.0
      %1219 = vmatpush1.msra.mxu0 0.0
      %1220 = vmatprep.subr.mxu0 0.0
      %1221 = vmatpush1.msra.mxu0 0.0
      %1222 = vmatprep.subr.mxu0 0.0
      %1223 = vmatpush1.msra.mxu0 0.0
      %1224 = vmatprep.subr.mxu0 0.0
      %1225 = vmatpush1.msra.mxu0 0.0
      %1226 = vmatprep.subr.mxu0 0.0
      %1227 = vmatpush1.msra.mxu0 0.0
      %1228 = vmatprep.subr.mxu0 0.0
      %1229 = vmatpush1.msra.mxu0 0.0
      %1230 = vmatprep.subr.mxu0 0.0
      %1231 = vmatpush1.msra.mxu0 0.0
      %1232 = vmatprep.subr.mxu0 0.0
      %1233 = vmatpush1.msra.mxu0 0.0
      %1234 = vmatprep.subr.mxu0 0.0
      %1235 = vmatpush1.msra.mxu0 0.0
      %1236 = vmatprep.subr.mxu0 0.0
      %1237 = vmatpush1.msra.mxu0 0.0
      %1238 = vmatprep.subr.mxu0 0.0
      %1239 = vmatpush1.msra.mxu0 0.0
      %1240 = vmatprep.subr.mxu0 0.0
      %1241 = vmatpush1.msra.mxu0 0.0
      %1242 = vmatprep.subr.mxu0 0.0
      %1243 = vmatpush1.msra.mxu0 0.0
      %1244 = vmatprep.subr.mxu0 0.0
      %1245 = vmatpush1.msra.mxu0 %v1209
      %1246 = vmatprep.subr.mxu0 0.0
      %1247 = vmatpush2.msra.mxu0 0.0
      %1248 = vmatprep.subr.mxu0 0.0
      %1249 = vmatpush2.msra.mxu0 0.0
      %1250 = vmatprep.subr.mxu0 0.0
      %1251 = vmatpush2.msra.mxu0 0.0
      %1252 = vmatprep.subr.mxu0 0.0
      %1253 = vmatpush2.msra.mxu0 0.0
      %1254 = vmatprep.subr.mxu0 0.0
      %1255 = vmatpush2.msra.mxu0 0.0
      %1256 = vmatprep.subr.mxu0 0.0
      %1257 = vmatpush2.msra.mxu0 0.0
      %1258 = vmatprep.subr.mxu0 0.0
      %1259 = vmatpush2.msra.mxu0 0.0
      %1260 = vmatprep.subr.mxu0 0.0
      %1261 = vmatpush2.msra.mxu0 0.0
      %1262 = vmatprep.subr.mxu0 0.0
      %1263 = vmatpush2.msra.mxu0 0.0
      %1264 = vmatprep.subr.mxu0 0.0
      %1265 = vmatpush2.msra.mxu0 0.0
      %1266 = vmatprep.subr.mxu0 0.0
      %1267 = vmatpush2.msra.mxu0 0.0
      %1268 = vmatprep.subr.mxu0 0.0
      %1269 = vmatpush2.msra.mxu0 0.0
      %1270 = vmatprep.subr.mxu0 0.0
      %1271 = vmatpush2.msra.mxu0 0.0
      %1272 = vmatprep.subr.mxu0 0.0
      %1273 = vmatpush2.msra.mxu0 0.0
      %1274 = vmatprep.subr.mxu0 0.0
      %1275 = vmatpush2.msra.mxu0 0.0
      %1276 = vmatprep.subr.mxu0 0.0
      %1277 = vmatpush2.msra.mxu0 0.0
      %1278 = vmatprep.mubr.f32.mxu0 0.0
      %1279 = vmatmul.mubr.f32.gmra.mxu0 %v1212
      %v1280 = vpop.f32.mrf.mxu0
      %v1281 = vadd.f32 0.0, %v1280
      %v1282 = vpop.f32.mrf.mxu0
      %1283 = vdwg.mxu0
      %v1284 = vadd.f32 %v1203, %v1281
      %s1285 = scalar_lea.vmem %s4, 24
      %v1286 = vld [vmem:[%s1285] sm:$0xff]
      %1287 = vrot.lane.b32.xlu0 %v1051, 118
      %v1288 = vpop.permute.xlu0 %1287
      %v1291 = vsel %vm1059, %v1286, 0
      %1293 = vmatprep.subr.mxu0 0.0
      %1294 = vmatpush1.msra.mxu0 0.0
      %1295 = vmatprep.subr.mxu0 0.0
      %1296 = vmatpush1.msra.mxu0 0.0
      %1297 = vmatprep.subr.mxu0 0.0
      %1298 = vmatpush1.msra.mxu0 0.0
      %1299 = vmatprep.subr.mxu0 0.0
      %1300 = vmatpush1.msra.mxu0 0.0
      %1301 = vmatprep.subr.mxu0 0.0
      %1302 = vmatpush1.msra.mxu0 0.0
      %1303 = vmatprep.subr.mxu0 0.0
      %1304 = vmatpush1.msra.mxu0 0.0
      %1305 = vmatprep.subr.mxu0 0.0
      %1306 = vmatpush1.msra.mxu0 0.0
      %1307 = vmatprep.subr.mxu0 0.0
      %1308 = vmatpush1.msra.mxu0 0.0
      %1309 = vmatprep.subr.mxu0 0.0
      %1310 = vmatpush1.msra.mxu0 0.0
      %1311 = vmatprep.subr.mxu0 0.0
      %1312 = vmatpush1.msra.mxu0 0.0
      %1313 = vmatprep.subr.mxu0 0.0
      %1314 = vmatpush1.msra.mxu0 0.0
      %1315 = vmatprep.subr.mxu0 0.0
      %1316 = vmatpush1.msra.mxu0 0.0
      %1317 = vmatprep.subr.mxu0 0.0
      %1318 = vmatpush1.msra.mxu0 0.0
      %1319 = vmatprep.subr.mxu0 0.0
      %1320 = vmatpush1.msra.mxu0 0.0
      %1321 = vmatprep.subr.mxu0 0.0
      %1322 = vmatpush1.msra.mxu0 0.0
      %1323 = vmatprep.subr.mxu0 0.0
      %1324 = vmatpush1.msra.mxu0 %v1288
      %1325 = vmatprep.subr.mxu0 0.0
      %1326 = vmatpush2.msra.mxu0 0.0
      %1327 = vmatprep.subr.mxu0 0.0
      %1328 = vmatpush2.msra.mxu0 0.0
      %1329 = vmatprep.subr.mxu0 0.0
      %1330 = vmatpush2.msra.mxu0 0.0
      %1331 = vmatprep.subr.mxu0 0.0
      %1332 = vmatpush2.msra.mxu0 0.0
      %1333 = vmatprep.subr.mxu0 0.0
      %1334 = vmatpush2.msra.mxu0 0.0
      %1335 = vmatprep.subr.mxu0 0.0
      %1336 = vmatpush2.msra.mxu0 0.0
      %1337 = vmatprep.subr.mxu0 0.0
      %1338 = vmatpush2.msra.mxu0 0.0
      %1339 = vmatprep.subr.mxu0 0.0
      %1340 = vmatpush2.msra.mxu0 0.0
      %1341 = vmatprep.subr.mxu0 0.0
      %1342 = vmatpush2.msra.mxu0 0.0
      %1343 = vmatprep.subr.mxu0 0.0
      %1344 = vmatpush2.msra.mxu0 0.0
      %1345 = vmatprep.subr.mxu0 0.0
      %1346 = vmatpush2.msra.mxu0 0.0
      %1347 = vmatprep.subr.mxu0 0.0
      %1348 = vmatpush2.msra.mxu0 0.0
      %1349 = vmatprep.subr.mxu0 0.0
      %1350 = vmatpush2.msra.mxu0 0.0
      %1351 = vmatprep.subr.mxu0 0.0
      %1352 = vmatpush2.msra.mxu0 0.0
      %1353 = vmatprep.subr.mxu0 0.0
      %1354 = vmatpush2.msra.mxu0 0.0
      %1355 = vmatprep.subr.mxu0 0.0
      %1356 = vmatpush2.msra.mxu0 0.0
      %1357 = vmatprep.mubr.f32.mxu0 0.0
      %1358 = vmatmul.mubr.f32.gmra.mxu0 %v1291
      %v1359 = vpop.f32.mrf.mxu0
      %v1360 = vadd.f32 0.0, %v1359
      %v1361 = vpop.f32.mrf.mxu0
      %1362 = vdwg.mxu0
      %v1363 = vadd.f32 %v1284, %v1360
      %s1364 = scalar_lea.vmem %s4, 32
      %v1365 = vld [vmem:[%s1364] sm:$0xff]
      %1366 = vrot.lane.b32.xlu0 %v1051, 117
      %v1367 = vpop.permute.xlu0 %1366
      %v1370 = vsel %vm1059, %v1365, 0
      %1372 = vmatprep.subr.mxu0 0.0
      %1373 = vmatpush1.msra.mxu0 0.0
      %1374 = vmatprep.subr.mxu0 0.0
      %1375 = vmatpush1.msra.mxu0 0.0
      %1376 = vmatprep.subr.mxu0 0.0
      %1377 = vmatpush1.msra.mxu0 0.0
      %1378 = vmatprep.subr.mxu0 0.0
      %1379 = vmatpush1.msra.mxu0 0.0
      %1380 = vmatprep.subr.mxu0 0.0
      %1381 = vmatpush1.msra.mxu0 0.0
      %1382 = vmatprep.subr.mxu0 0.0
      %1383 = vmatpush1.msra.mxu0 0.0
      %1384 = vmatprep.subr.mxu0 0.0
      %1385 = vmatpush1.msra.mxu0 0.0
      %1386 = vmatprep.subr.mxu0 0.0
      %1387 = vmatpush1.msra.mxu0 0.0
      %1388 = vmatprep.subr.mxu0 0.0
      %1389 = vmatpush1.msra.mxu0 0.0
      %1390 = vmatprep.subr.mxu0 0.0
      %1391 = vmatpush1.msra.mxu0 0.0
      %1392 = vmatprep.subr.mxu0 0.0
      %1393 = vmatpush1.msra.mxu0 0.0
      %1394 = vmatprep.subr.mxu0 0.0
      %1395 = vmatpush1.msra.mxu0 0.0
      %1396 = vmatprep.subr.mxu0 0.0
      %1397 = vmatpush1.msra.mxu0 0.0
      %1398 = vmatprep.subr.mxu0 0.0
      %1399 = vmatpush1.msra.mxu0 0.0
      %1400 = vmatprep.subr.mxu0 0.0
      %1401 = vmatpush1.msra.mxu0 0.0
      %1402 = vmatprep.subr.mxu0 0.0
      %1403 = vmatpush1.msra.mxu0 %v1367
      %1404 = vmatprep.subr.mxu0 0.0
      %1405 = vmatpush2.msra.mxu0 0.0
      %1406 = vmatprep.subr.mxu0 0.0
      %1407 = vmatpush2.msra.mxu0 0.0
      %1408 = vmatprep.subr.mxu0 0.0
      %1409 = vmatpush2.msra.mxu0 0.0
      %1410 = vmatprep.subr.mxu0 0.0
      %1411 = vmatpush2.msra.mxu0 0.0
      %1412 = vmatprep.subr.mxu0 0.0
      %1413 = vmatpush2.msra.mxu0 0.0
      %1414 = vmatprep.subr.mxu0 0.0
      %1415 = vmatpush2.msra.mxu0 0.0
      %1416 = vmatprep.subr.mxu0 0.0
      %1417 = vmatpush2.msra.mxu0 0.0
      %1418 = vmatprep.subr.mxu0 0.0
      %1419 = vmatpush2.msra.mxu0 0.0
      %1420 = vmatprep.subr.mxu0 0.0
      %1421 = vmatpush2.msra.mxu0 0.0
      %1422 = vmatprep.subr.mxu0 0.0
      %1423 = vmatpush2.msra.mxu0 0.0
      %1424 = vmatprep.subr.mxu0 0.0
      %1425 = vmatpush2.msra.mxu0 0.0
      %1426 = vmatprep.subr.mxu0 0.0
      %1427 = vmatpush2.msra.mxu0 0.0
      %1428 = vmatprep.subr.mxu0 0.0
      %1429 = vmatpush2.msra.mxu0 0.0
      %1430 = vmatprep.subr.mxu0 0.0
      %1431 = vmatpush2.msra.mxu0 0.0
      %1432 = vmatprep.subr.mxu0 0.0
      %1433 = vmatpush2.msra.mxu0 0.0
      %1434 = vmatprep.subr.mxu0 0.0
      %1435 = vmatpush2.msra.mxu0 0.0
      %1436 = vmatprep.mubr.f32.mxu0 0.0
      %1437 = vmatmul.mubr.f32.gmra.mxu0 %v1370
      %v1438 = vpop.f32.mrf.mxu0
      %v1439 = vadd.f32 0.0, %v1438
      %v1440 = vpop.f32.mrf.mxu0
      %1441 = vdwg.mxu0
      %v1442 = vadd.f32 %v1363, %v1439
      %s1443 = scalar_lea.vmem %s4, 40
      %v1444 = vld [vmem:[%s1443] sm:$0xff]
      %1445 = vrot.lane.b32.xlu0 %v1051, 116
      %v1446 = vpop.permute.xlu0 %1445
      %v1449 = vsel %vm1059, %v1444, 0
      %1451 = vmatprep.subr.mxu0 0.0
      %1452 = vmatpush1.msra.mxu0 0.0
      %1453 = vmatprep.subr.mxu0 0.0
      %1454 = vmatpush1.msra.mxu0 0.0
      %1455 = vmatprep.subr.mxu0 0.0
      %1456 = vmatpush1.msra.mxu0 0.0
      %1457 = vmatprep.subr.mxu0 0.0
      %1458 = vmatpush1.msra.mxu0 0.0
      %1459 = vmatprep.subr.mxu0 0.0
      %1460 = vmatpush1.msra.mxu0 0.0
      %1461 = vmatprep.subr.mxu0 0.0
      %1462 = vmatpush1.msra.mxu0 0.0
      %1463 = vmatprep.subr.mxu0 0.0
      %1464 = vmatpush1.msra.mxu0 0.0
      %1465 = vmatprep.subr.mxu0 0.0
      %1466 = vmatpush1.msra.mxu0 0.0
      %1467 = vmatprep.subr.mxu0 0.0
      %1468 = vmatpush1.msra.mxu0 0.0
      %1469 = vmatprep.subr.mxu0 0.0
      %1470 = vmatpush1.msra.mxu0 0.0
      %1471 = vmatprep.subr.mxu0 0.0
      %1472 = vmatpush1.msra.mxu0 0.0
      %1473 = vmatprep.subr.mxu0 0.0
      %1474 = vmatpush1.msra.mxu0 0.0
      %1475 = vmatprep.subr.mxu0 0.0
      %1476 = vmatpush1.msra.mxu0 0.0
      %1477 = vmatprep.subr.mxu0 0.0
      %1478 = vmatpush1.msra.mxu0 0.0
      %1479 = vmatprep.subr.mxu0 0.0
      %1480 = vmatpush1.msra.mxu0 0.0
      %1481 = vmatprep.subr.mxu0 0.0
      %1482 = vmatpush1.msra.mxu0 %v1446
      %1483 = vmatprep.subr.mxu0 0.0
      %1484 = vmatpush2.msra.mxu0 0.0
      %1485 = vmatprep.subr.mxu0 0.0
      %1486 = vmatpush2.msra.mxu0 0.0
      %1487 = vmatprep.subr.mxu0 0.0
      %1488 = vmatpush2.msra.mxu0 0.0
      %1489 = vmatprep.subr.mxu0 0.0
      %1490 = vmatpush2.msra.mxu0 0.0
      %1491 = vmatprep.subr.mxu0 0.0
      %1492 = vmatpush2.msra.mxu0 0.0
      %1493 = vmatprep.subr.mxu0 0.0
      %1494 = vmatpush2.msra.mxu0 0.0
      %1495 = vmatprep.subr.mxu0 0.0
      %1496 = vmatpush2.msra.mxu0 0.0
      %1497 = vmatprep.subr.mxu0 0.0
      %1498 = vmatpush2.msra.mxu0 0.0
      %1499 = vmatprep.subr.mxu0 0.0
      %1500 = vmatpush2.msra.mxu0 0.0
      %1501 = vmatprep.subr.mxu0 0.0
      %1502 = vmatpush2.msra.mxu0 0.0
      %1503 = vmatprep.subr.mxu0 0.0
      %1504 = vmatpush2.msra.mxu0 0.0
      %1505 = vmatprep.subr.mxu0 0.0
      %1506 = vmatpush2.msra.mxu0 0.0
      %1507 = vmatprep.subr.mxu0 0.0
      %1508 = vmatpush2.msra.mxu0 0.0
      %1509 = vmatprep.subr.mxu0 0.0
      %1510 = vmatpush2.msra.mxu0 0.0
      %1511 = vmatprep.subr.mxu0 0.0
      %1512 = vmatpush2.msra.mxu0 0.0
      %1513 = vmatprep.subr.mxu0 0.0
      %1514 = vmatpush2.msra.mxu0 0.0
      %1515 = vmatprep.mubr.f32.mxu0 0.0
      %1516 = vmatmul.mubr.f32.gmra.mxu0 %v1449
      %v1517 = vpop.f32.mrf.mxu0
      %v1518 = vadd.f32 0.0, %v1517
      %v1519 = vpop.f32.mrf.mxu0
      %1520 = vdwg.mxu0
      %v1521 = vadd.f32 %v1442, %v1518
      %s1522 = scalar_lea.vmem %s4, 48
      %v1523 = vld [vmem:[%s1522] sm:$0xff]
      %1524 = vrot.lane.b32.xlu0 %v1051, 108
      %v1525 = vpop.permute.xlu0 %1524
      %v1528 = vsel %vm1059, %v1523, 0
      %1530 = vmatprep.subr.mxu0 0.0
      %1531 = vmatpush1.msra.mxu0 0.0
      %1532 = vmatprep.subr.mxu0 0.0
      %1533 = vmatpush1.msra.mxu0 0.0
      %1534 = vmatprep.subr.mxu0 0.0
      %1535 = vmatpush1.msra.mxu0 0.0
      %1536 = vmatprep.subr.mxu0 0.0
      %1537 = vmatpush1.msra.mxu0 0.0
      %1538 = vmatprep.subr.mxu0 0.0
      %1539 = vmatpush1.msra.mxu0 0.0
      %1540 = vmatprep.subr.mxu0 0.0
      %1541 = vmatpush1.msra.mxu0 0.0
      %1542 = vmatprep.subr.mxu0 0.0
      %1543 = vmatpush1.msra.mxu0 0.0
      %1544 = vmatprep.subr.mxu0 0.0
      %1545 = vmatpush1.msra.mxu0 0.0
      %1546 = vmatprep.subr.mxu0 0.0
      %1547 = vmatpush1.msra.mxu0 0.0
      %1548 = vmatprep.subr.mxu0 0.0
      %1549 = vmatpush1.msra.mxu0 0.0
      %1550 = vmatprep.subr.mxu0 0.0
      %1551 = vmatpush1.msra.mxu0 0.0
      %1552 = vmatprep.subr.mxu0 0.0
      %1553 = vmatpush1.msra.mxu0 0.0
      %1554 = vmatprep.subr.mxu0 0.0
      %1555 = vmatpush1.msra.mxu0 0.0
      %1556 = vmatprep.subr.mxu0 0.0
      %1557 = vmatpush1.msra.mxu0 0.0
      %1558 = vmatprep.subr.mxu0 0.0
      %1559 = vmatpush1.msra.mxu0 0.0
      %1560 = vmatprep.subr.mxu0 0.0
      %1561 = vmatpush1.msra.mxu0 %v1525
      %1562 = vmatprep.subr.mxu0 0.0
      %1563 = vmatpush2.msra.mxu0 0.0
      %1564 = vmatprep.subr.mxu0 0.0
      %1565 = vmatpush2.msra.mxu0 0.0
      %1566 = vmatprep.subr.mxu0 0.0
      %1567 = vmatpush2.msra.mxu0 0.0
      %1568 = vmatprep.subr.mxu0 0.0
      %1569 = vmatpush2.msra.mxu0 0.0
      %1570 = vmatprep.subr.mxu0 0.0
      %1571 = vmatpush2.msra.mxu0 0.0
      %1572 = vmatprep.subr.mxu0 0.0
      %1573 = vmatpush2.msra.mxu0 0.0
      %1574 = vmatprep.subr.mxu0 0.0
      %1575 = vmatpush2.msra.mxu0 0.0
      %1576 = vmatprep.subr.mxu0 0.0
      %1577 = vmatpush2.msra.mxu0 0.0
      %1578 = vmatprep.subr.mxu0 0.0
      %1579 = vmatpush2.msra.mxu0 0.0
      %1580 = vmatprep.subr.mxu0 0.0
      %1581 = vmatpush2.msra.mxu0 0.0
      %1582 = vmatprep.subr.mxu0 0.0
      %1583 = vmatpush2.msra.mxu0 0.0
      %1584 = vmatprep.subr.mxu0 0.0
      %1585 = vmatpush2.msra.mxu0 0.0
      %1586 = vmatprep.subr.mxu0 0.0
      %1587 = vmatpush2.msra.mxu0 0.0
      %1588 = vmatprep.subr.mxu0 0.0
      %1589 = vmatpush2.msra.mxu0 0.0
      %1590 = vmatprep.subr.mxu0 0.0
      %1591 = vmatpush2.msra.mxu0 0.0
      %1592 = vmatprep.subr.mxu0 0.0
      %1593 = vmatpush2.msra.mxu0 0.0
      %1594 = vmatprep.mubr.f32.mxu0 0.0
      %1595 = vmatmul.mubr.f32.gmra.mxu0 %v1528
      %v1596 = vpop.f32.mrf.mxu0
      %v1597 = vadd.f32 0.0, %v1596
      %v1598 = vpop.f32.mrf.mxu0
      %1599 = vdwg.mxu0
      %v1600 = vadd.f32 %v1521, %v1597
      %s1601 = scalar_lea.vmem %s4, 56
      %v1602 = vld [vmem:[%s1601] sm:$0xff]
      %1603 = vrot.lane.b32.xlu0 %v1051, 107
      %v1604 = vpop.permute.xlu0 %1603
      %v1607 = vsel %vm1059, %v1602, 0
      %1609 = vmatprep.subr.mxu0 0.0
      %1610 = vmatpush1.msra.mxu0 0.0
      %1611 = vmatprep.subr.mxu0 0.0
      %1612 = vmatpush1.msra.mxu0 0.0
      %1613 = vmatprep.subr.mxu0 0.0
      %1614 = vmatpush1.msra.mxu0 0.0
      %1615 = vmatprep.subr.mxu0 0.0
      %1616 = vmatpush1.msra.mxu0 0.0
      %1617 = vmatprep.subr.mxu0 0.0
      %1618 = vmatpush1.msra.mxu0 0.0
      %1619 = vmatprep.subr.mxu0 0.0
      %1620 = vmatpush1.msra.mxu0 0.0
      %1621 = vmatprep.subr.mxu0 0.0
      %1622 = vmatpush1.msra.mxu0 0.0
      %1623 = vmatprep.subr.mxu0 0.0
      %1624 = vmatpush1.msra.mxu0 0.0
      %1625 = vmatprep.subr.mxu0 0.0
      %1626 = vmatpush1.msra.mxu0 0.0
      %1627 = vmatprep.subr.mxu0 0.0
      %1628 = vmatpush1.msra.mxu0 0.0
      %1629 = vmatprep.subr.mxu0 0.0
      %1630 = vmatpush1.msra.mxu0 0.0
      %1631 = vmatprep.subr.mxu0 0.0
      %1632 = vmatpush1.msra.mxu0 0.0
      %1633 = vmatprep.subr.mxu0 0.0
      %1634 = vmatpush1.msra.mxu0 0.0
      %1635 = vmatprep.subr.mxu0 0.0
      %1636 = vmatpush1.msra.mxu0 0.0
      %1637 = vmatprep.subr.mxu0 0.0
      %1638 = vmatpush1.msra.mxu0 0.0
      %1639 = vmatprep.subr.mxu0 0.0
      %1640 = vmatpush1.msra.mxu0 %v1604
      %1641 = vmatprep.subr.mxu0 0.0
      %1642 = vmatpush2.msra.mxu0 0.0
      %1643 = vmatprep.subr.mxu0 0.0
      %1644 = vmatpush2.msra.mxu0 0.0
      %1645 = vmatprep.subr.mxu0 0.0
      %1646 = vmatpush2.msra.mxu0 0.0
      %1647 = vmatprep.subr.mxu0 0.0
      %1648 = vmatpush2.msra.mxu0 0.0
      %1649 = vmatprep.subr.mxu0 0.0
      %1650 = vmatpush2.msra.mxu0 0.0
      %1651 = vmatprep.subr.mxu0 0.0
      %1652 = vmatpush2.msra.mxu0 0.0
      %1653 = vmatprep.subr.mxu0 0.0
      %1654 = vmatpush2.msra.mxu0 0.0
      %1655 = vmatprep.subr.mxu0 0.0
      %1656 = vmatpush2.msra.mxu0 0.0
      %1657 = vmatprep.subr.mxu0 0.0
      %1658 = vmatpush2.msra.mxu0 0.0
      %1659 = vmatprep.subr.mxu0 0.0
      %1660 = vmatpush2.msra.mxu0 0.0
      %1661 = vmatprep.subr.mxu0 0.0
      %1662 = vmatpush2.msra.mxu0 0.0
      %1663 = vmatprep.subr.mxu0 0.0
      %1664 = vmatpush2.msra.mxu0 0.0
      %1665 = vmatprep.subr.mxu0 0.0
      %1666 = vmatpush2.msra.mxu0 0.0
      %1667 = vmatprep.subr.mxu0 0.0
      %1668 = vmatpush2.msra.mxu0 0.0
      %1669 = vmatprep.subr.mxu0 0.0
      %1670 = vmatpush2.msra.mxu0 0.0
      %1671 = vmatprep.subr.mxu0 0.0
      %1672 = vmatpush2.msra.mxu0 0.0
      %1673 = vmatprep.mubr.f32.mxu0 0.0
      %1674 = vmatmul.mubr.f32.gmra.mxu0 %v1607
      %v1675 = vpop.f32.mrf.mxu0
      %v1676 = vadd.f32 0.0, %v1675
      %v1677 = vpop.f32.mrf.mxu0
      %1678 = vdwg.mxu0
      %v1679 = vadd.f32 %v1600, %v1676
      %s1680 = scalar_lea.vmem %s4, 64
      %v1681 = vld [vmem:[%s1680] sm:$0xff]
      %1682 = vrot.lane.b32.xlu0 %v1051, 106
      %v1683 = vpop.permute.xlu0 %1682
      %v1686 = vsel %vm1059, %v1681, 0
      %1688 = vmatprep.subr.mxu0 0.0
      %1689 = vmatpush1.msra.mxu0 0.0
      %1690 = vmatprep.subr.mxu0 0.0
      %1691 = vmatpush1.msra.mxu0 0.0
      %1692 = vmatprep.subr.mxu0 0.0
      %1693 = vmatpush1.msra.mxu0 0.0
      %1694 = vmatprep.subr.mxu0 0.0
      %1695 = vmatpush1.msra.mxu0 0.0
      %1696 = vmatprep.subr.mxu0 0.0
      %1697 = vmatpush1.msra.mxu0 0.0
      %1698 = vmatprep.subr.mxu0 0.0
      %1699 = vmatpush1.msra.mxu0 0.0
      %1700 = vmatprep.subr.mxu0 0.0
      %1701 = vmatpush1.msra.mxu0 0.0
      %1702 = vmatprep.subr.mxu0 0.0
      %1703 = vmatpush1.msra.mxu0 0.0
      %1704 = vmatprep.subr.mxu0 0.0
      %1705 = vmatpush1.msra.mxu0 0.0
      %1706 = vmatprep.subr.mxu0 0.0
      %1707 = vmatpush1.msra.mxu0 0.0
      %1708 = vmatprep.subr.mxu0 0.0
      %1709 = vmatpush1.msra.mxu0 0.0
      %1710 = vmatprep.subr.mxu0 0.0
      %1711 = vmatpush1.msra.mxu0 0.0
      %1712 = vmatprep.subr.mxu0 0.0
      %1713 = vmatpush1.msra.mxu0 0.0
      %1714 = vmatprep.subr.mxu0 0.0
      %1715 = vmatpush1.msra.mxu0 0.0
      %1716 = vmatprep.subr.mxu0 0.0
      %1717 = vmatpush1.msra.mxu0 0.0
      %1718 = vmatprep.subr.mxu0 0.0
      %1719 = vmatpush1.msra.mxu0 %v1683
      %1720 = vmatprep.subr.mxu0 0.0
      %1721 = vmatpush2.msra.mxu0 0.0
      %1722 = vmatprep.subr.mxu0 0.0
      %1723 = vmatpush2.msra.mxu0 0.0
      %1724 = vmatprep.subr.mxu0 0.0
      %1725 = vmatpush2.msra.mxu0 0.0
      %1726 = vmatprep.subr.mxu0 0.0
      %1727 = vmatpush2.msra.mxu0 0.0
      %1728 = vmatprep.subr.mxu0 0.0
      %1729 = vmatpush2.msra.mxu0 0.0
      %1730 = vmatprep.subr.mxu0 0.0
      %1731 = vmatpush2.msra.mxu0 0.0
      %1732 = vmatprep.subr.mxu0 0.0
      %1733 = vmatpush2.msra.mxu0 0.0
      %1734 = vmatprep.subr.mxu0 0.0
      %1735 = vmatpush2.msra.mxu0 0.0
      %1736 = vmatprep.subr.mxu0 0.0
      %1737 = vmatpush2.msra.mxu0 0.0
      %1738 = vmatprep.subr.mxu0 0.0
      %1739 = vmatpush2.msra.mxu0 0.0
      %1740 = vmatprep.subr.mxu0 0.0
      %1741 = vmatpush2.msra.mxu0 0.0
      %1742 = vmatprep.subr.mxu0 0.0
      %1743 = vmatpush2.msra.mxu0 0.0
      %1744 = vmatprep.subr.mxu0 0.0
      %1745 = vmatpush2.msra.mxu0 0.0
      %1746 = vmatprep.subr.mxu0 0.0
      %1747 = vmatpush2.msra.mxu0 0.0
      %1748 = vmatprep.subr.mxu0 0.0
      %1749 = vmatpush2.msra.mxu0 0.0
      %1750 = vmatprep.subr.mxu0 0.0
      %1751 = vmatpush2.msra.mxu0 0.0
      %1752 = vmatprep.mubr.f32.mxu0 0.0
      %1753 = vmatmul.mubr.f32.gmra.mxu0 %v1686
      %v1754 = vpop.f32.mrf.mxu0
      %v1755 = vadd.f32 0.0, %v1754
      %v1756 = vpop.f32.mrf.mxu0
      %1757 = vdwg.mxu0
      %v1758 = vadd.f32 %v1679, %v1755
      %v1759 = vld [vmem:[%s5] sm:$0xff]
      %1761 = vset.pattern.permute.xlu0 0
      %1762 = vperm.xlu0 %1761, %v1759
      %v1763 = vpop.permute.xlu0 %1762
      %v1765 = vmul.f32 %v1758, %v1763
      %v1766 = vld [vmem:[%s6] sm:$0xff]
      %1768 = vset.pattern.permute.xlu0 0
      %1769 = vperm.xlu0 %1768, %v1766
      %v1770 = vpop.permute.xlu0 %1769
      %v1772 = vadd.f32 %v1765, %v1770
      %v1773 = vmax.f32 %v1772, 0.0
      %v1774 = vmul.f32 %v1773, %v1040
      %1775 = vst.msk [vmem:[%s300] sm:$0xff] %vm1043, 0.0
      %1777 = vrot.lane.b32.xlu0 %v1774, 11
      %v1778 = vpop.permute.xlu0 %1777
      %1780 = vst.msk [vmem:[%s300] sm:$0xff] %vm1049, %v1778
      %p1781 = scmp.lt.s32.totalorder %s19, 1
      %s1782 = scalar_select %p1781, %s19, 1
      %s1783 = smul.addr %s1782, 8
      %s1784 = scalar_lea.vmem %s8, %s1783
      // Predicated region
      $region53: #{down_forward.3} parent=51 // pred_check
        %p1785 = pneg %p210
      $region54: #{down_forward.3} parent=51 // pred_check_branch
        %1787 = sbr.rel (%p1785) target = $region56
      $region55: #{down_forward.3} parent=51 // pred_region
        _
      $region56: #{down_forward.3} parent=51 // pred_fallthru
        _
    $region52: #{down_forward.3} parent=5 // pred_fallthru
      _
    %p1788 = scmp.le.s32.totalorder 2, %s14
    // Predicated region
    $region57: #{down_forward.3} parent=5 // pred_check
      %p1789 = pneg %p1788
    $region58: #{down_forward.3} parent=5 // pred_check_branch
      %1791 = sbr.rel (%p1789) target = $region60
    $region59: #{down_forward.3} parent=5 // pred_region
      %s1792 = ssub.s32 %s14, 2
      // Predicated region
      $region61: #{down_forward.3} parent=59 // pred_check
        %p1793 = pneg %p216
      $region62: #{down_forward.3} parent=59 // pred_check_branch
        %1795 = sbr.rel (%p1793) target = $region64
      $region63: #{down_forward.3} parent=59 // pred_region
        %p1796 = scmp.lt.s32.totalorder %s20, 1
        %s1797 = scalar_select %p1796, %s20, 1
        %s1798 = smul.addr %s1797, 8
        %s1799 = scalar_lea.vmem %s8, %s1798
      $region64: #{down_forward.3} parent=59 // pred_fallthru
        _
    $region60: #{down_forward.3} parent=5 // pred_fallthru
      _
  $region6: #{down_forward.3} parent=0 // loop_footer
    %s18 = sadd.s32 1, %s14
  $region7: #{down_forward.3} parent=0 // loop_footer_branch
    %13 = sbr.rel target = $region3
  $region8: #{down_forward.3} parent=0 // loop_exit
    _

</llo_original>
